<compile_context>
chip_gen: v5e
topology: v5e:2x2
jax: 0.10.0
libtpu: 0.0.40
codegen_flags: <defaults>
</compile_context>

<pallas_src>
import numpy as np

import jax
import jax.numpy as jnp
from jax import lax
from jax.experimental import pallas as pl
from jax.experimental.pallas import tpu as pltpu


def _round_up(x, m):
    return (x + m - 1) // m * m


def _vmem_budget_bytes():
    """Generation-aware VMEM budget (~60% of physical VMEM)."""
    try:
        phys = pltpu.get_tpu_info().vmem_capacity_bytes
    except Exception:  # query unavailable: assume v7x-like 64 MiB (safe on all gens)
        phys = 64 * 1024 * 1024
    return max(24 * 1024 * 1024, int(phys * 0.6))


def _downsample_conv_kernel(ee_ref, eeh_ref, eo_ref, eoh_ref, oe_ref, oo_ref,
                            w_ref, b_ref, o_ref):
    """One (batch, row-strip, Cout-tile) grid step.

    ee/eo/oe/oo are the four stride-2 phases of the zero-padded input
    (e=even, o=odd padded row/col index).  ee/eo additionally get a one-row
    halo block because the kh=2 taps read one phase-row further down.  Each of
    the 9 taps is a contiguous (TH, Wo, C) window of one phase, contributing
    one K=C MXU dot; accumulation is f32 with the bias folded into the init.
    """
    th = o_ref.shape[1]          # output rows in this strip
    wo = o_ref.shape[2]          # output width (full)
    tn = o_ref.shape[3]          # Cout tile (lane-dense, multiple of 128)
    c = w_ref.shape[1]           # input channels
    m = th * wo

    ee = jnp.concatenate([ee_ref[0], eeh_ref[0]], axis=0)   # (th+1, wo+1, c)
    eo = jnp.concatenate([eo_ref[0], eoh_ref[0]], axis=0)   # (th+1, wo,   c)
    oe = oe_ref[0]                                           # (th,   wo+1, c)
    oo = oo_ref[0]                                           # (th,   wo,   c)

    def tap(src, r0, c0):        # (th, wo, c) window -> (m, c) matmul operand
        return src[r0:r0 + th, c0:c0 + wo, :].reshape(m, c)

    # Tap t = kh*3 + kw reads phase[row oh + kh//2 (or oh), col ow + kw//2 (or ow)].
    taps = (
        (ee, 0, 0), (eo, 0, 0), (ee, 0, 1),      # kh = 0, kw = 0,1,2
        (oe, 0, 0), (oo, 0, 0), (oe, 0, 1),      # kh = 1
        (ee, 1, 0), (eo, 1, 0), (ee, 1, 1),      # kh = 2
    )
    acc = jnp.broadcast_to(b_ref[...], (m, tn)).astype(jnp.float32)
    for t, (src, r0, c0) in enumerate(taps):
        acc = acc + jnp.dot(tap(src, r0, c0), w_ref[t],
                            preferred_element_type=jnp.float32)
    o_ref[...] = acc.reshape(1, th, wo, tn).astype(o_ref.dtype)


def downsample_pallas(x_nchw, weight, bias, *, compute_dtype=jnp.bfloat16,
                      out_dtype=None, channels_last_output=False,
                      vmem_budget_bytes=None):
    """Equivalent of nn.Conv2d(C, C, 3, stride=2, padding=1) on NCHW input.

    x_nchw: (N, C, H, W) with H, W even.
    weight: (C_out, C_in, 3, 3)  (PyTorch layout).
    bias:   (C_out,).
    Returns (N, C_out, H//2, W//2) in the input dtype by default.
    """
    N, C, H, W = x_nchw.shape
    if H % 2 == 1:
        raise ValueError("downsampling tensor height should be even")
    if W % 2 == 1:
        raise ValueError("downsampling tensor width should be even")
    Cout = weight.shape[0]
    Ho, Wo = H // 2, W // 2
    out_dtype = x_nchw.dtype if out_dtype is None else out_dtype

    in_bytes = np.dtype(compute_dtype).itemsize
    out_bytes = np.dtype(out_dtype).itemsize
    budget = _vmem_budget_bytes() if vmem_budget_bytes is None else int(vmem_budget_bytes)
    target = int(budget * 0.8)   # headroom for kernel-internal temporaries/spills

    # ---- Phase decomposition (~1.0x input; replaces the 2.25x im2col) -------
    # Phases are indexed by the parity of the *padded* coordinate 2*o + k.
    x_nhwc = jnp.transpose(x_nchw, (0, 2, 3, 1)).astype(compute_dtype)
    ee = jnp.pad(x_nhwc[:, 1::2, 1::2, :], ((0, 0), (1, 0), (1, 0), (0, 0)))  # (N,Ho+1,Wo+1,C)
    eo = jnp.pad(x_nhwc[:, 1::2, 0::2, :], ((0, 0), (1, 0), (0, 0), (0, 0)))  # (N,Ho+1,Wo,  C)
    oe = jnp.pad(x_nhwc[:, 0::2, 1::2, :], ((0, 0), (0, 0), (1, 0), (0, 0)))  # (N,Ho,  Wo+1,C)
    oo = x_nhwc[:, 0::2, 0::2, :]                                             # (N,Ho,  Wo,  C)

    # Weights: (Cout,Cin,3,3) -> (kh,kw,Cin,Cout) -> (9, Cin, Cout_pad); Cout
    # padded to a lane-dense multiple of 128 (unmasked vst, full MXU N).
    Cout_pad = _round_up(Cout, 128)
    w_taps = jnp.transpose(weight, (2, 3, 1, 0)).reshape(9, C, Cout)
    w_taps = jnp.pad(w_taps, ((0, 0), (0, 0), (0, Cout_pad - Cout))).astype(compute_dtype)
    b_pad = jnp.pad(bias, (0, Cout_pad - Cout)).reshape(1, Cout_pad).astype(jnp.float32)

    # ---- Tile sizing against the generation-aware VMEM budget ----------------
    # Cout tile: keep weights fully VMEM-resident when they fit in ~1/3 of the
    # budget, otherwise add a Cout grid axis (phase tiles stay resident across it).
    tn = Cout_pad
    wt_budget = target // 3
    while tn > 128 and 2 * 9 * C * tn * in_bytes > wt_budget:
        tn = max(128, _round_up(tn // 2, 128))
    n_ct = pl.cdiv(Cout_pad, tn)

    def step_bytes(th):
        phase = 2 * th * (2 * (Wo + 1) + 2 * Wo) * C * in_bytes   # double-buffered phase streams
        halo = 2 * 2 * (2 * Wo + 1) * C * in_bytes                # double-buffered halo rows
        outb = 2 * th * Wo * tn * out_bytes                       # double-buffered output tile
        wts = 2 * (9 * C * tn * in_bytes + tn * 4)                # resident weights + f32 bias
        temps = th * Wo * (4 * tn + 3 * C * in_bytes)             # f32 acc + tap copies
        return phase + halo + outb + wts + temps

    th = Ho                                   # start maximal, shrink only if over budget
    while th > 8 and step_bytes(th) > target:
        th = max(8, _round_up(th // 2, 8))    # keep TH a multiple of 8
    while th > 1 and step_bytes(th) > target:
        th -= 1
    # v7x megacore: guarantee >= 2 steps on the parallel grid axes.
    if N * n_ct * pl.cdiv(Ho, th) < 2 and Ho > 1:
        th = pl.cdiv(Ho, 2)

    grid = (N, pl.cdiv(Ho, th), n_ct)

    row_idx = lambda n, i, j: (n, i, 0, 0)
    # Halo row = first row of the next strip; block_shape 1 along H makes the
    # returned index element-granular.  Clamped so the DMA never goes OOB.
    halo_idx = lambda n, i, j: (n, jnp.minimum((i + 1) * th, Ho), 0, 0)

    flops = 2 * N * Ho * Wo * 9 * C * Cout_pad
    phase_bytes = N * C * in_bytes * ((Ho + 1) * (Wo + 1) + (Ho + 1) * Wo
                                      + Ho * (Wo + 1) + Ho * Wo)
    bytes_accessed = (phase_bytes + 9 * C * Cout_pad * in_bytes
                      + N * Ho * Wo * Cout_pad * out_bytes)

    out_nhwc = pl.pallas_call(
        _downsample_conv_kernel,
        out_shape=jax.ShapeDtypeStruct((N, Ho, Wo, Cout_pad), out_dtype),
        grid=grid,
        in_specs=[
            pl.BlockSpec((1, th, Wo + 1, C), row_idx),              # ee rows  (kh=0/2, kw=0/2)
            pl.BlockSpec((1, 1, Wo + 1, C), halo_idx),              # ee halo row (kh=2)
            pl.BlockSpec((1, th, Wo, C), row_idx),                  # eo rows  (kh=0/2, kw=1)
            pl.BlockSpec((1, 1, Wo, C), halo_idx),                  # eo halo row (kh=2)
            pl.BlockSpec((1, th, Wo + 1, C), row_idx),              # oe rows  (kh=1, kw=0/2)
            pl.BlockSpec((1, th, Wo, C), row_idx),                  # oo rows  (kh=1, kw=1)
            pl.BlockSpec((9, C, tn), lambda n, i, j: (0, 0, j)),    # weights (resident / Cout-tiled)
            pl.BlockSpec((1, tn), lambda n, i, j: (0, j)),          # bias (f32)
        ],
        out_specs=pl.BlockSpec((1, th, Wo, tn), lambda n, i, j: (n, i, 0, j)),
        compiler_params=pltpu.CompilerParams(
            dimension_semantics=("parallel", "parallel", "arbitrary"),
            vmem_limit_bytes=int(budget)),
        cost_estimate=pl.CostEstimate(flops=int(flops), transcendentals=0,
                                      bytes_accessed=int(bytes_accessed)),
    )(ee, ee, eo, eo, oe, oo, w_taps, b_pad)

    out_nhwc = out_nhwc[..., :Cout]
    if channels_last_output:
        return out_nhwc
    # PyTorch semantics require NCHW; NHWC consumers should pass
    # channels_last_output=True to skip this extra HBM pass.
    return jnp.transpose(out_nhwc, (0, 3, 1, 2))


def _reference_conv(x_nchw, weight, bias):
    """Pure-JAX reference: identical to nn.Conv2d(C, C, 3, stride=2, padding=1)."""
    out = lax.conv_general_dilated(
        x_nchw, weight,
        window_strides=(2, 2),
        padding=((1, 1), (1, 1)),
        dimension_numbers=("NCHW", "OIHW", "NCHW"),
        precision=lax.Precision.HIGHEST,
    )
    return out + bias.reshape(1, -1, 1, 1)


if __name__ == "__main__":
    key = jax.random.PRNGKey(0)
    kx, kw_, kb = jax.random.split(key, 3)

    N, C, H, W = 2, 4, 16, 16
    x = jax.random.normal(kx, (N, C, H, W), dtype=jnp.float32)

    # Deterministic parameter init (matches nn.Conv2d(C, C, 3) shapes).
    fan_in = C * 3 * 3
    bound = 1.0 / (fan_in ** 0.5)
    weight = jax.random.uniform(kw_, (C, C, 3, 3), jnp.float32, -bound, bound)
    bias = jax.random.uniform(kb, (C,), jnp.float32, -bound, bound)

    ref = _reference_conv(x, weight, bias)

    # f32 precision path: tight check against the XLA conv reference.
    out_f32 = jax.block_until_ready(
        downsample_pallas(x, weight, bias, compute_dtype=jnp.float32))
    assert out_f32.shape == (N, C, H // 2, W // 2), out_f32.shape
    assert jnp.allclose(out_f32, ref, atol=1e-3, rtol=1e-3), float(
        jnp.max(jnp.abs(out_f32 - ref)))

    # Default bf16-MXU path (f32 accumulation): loosened tolerance.
    out_bf16 = jax.block_until_ready(downsample_pallas(x, weight, bias))
    assert out_bf16.shape == (N, C, H // 2, W // 2), out_bf16.shape
    assert jnp.allclose(out_bf16, ref, atol=5e-2, rtol=5e-2), float(
        jnp.max(jnp.abs(out_bf16 - ref)))

    print("KERNEL_OK")
</pallas_src>

<mosaic_0001>
module attributes {stable_mosaic.version = 11 : i64} {
  func.func @_downsample_conv_kernel(%arg0: i32, %arg1: i32, %arg2: i32, %arg3: memref<1x8x9x4xf32, #tpu.memory_space<vmem>>, %arg4: memref<1x1x9x4xf32, #tpu.memory_space<vmem>>, %arg5: memref<1x8x8x4xf32, #tpu.memory_space<vmem>>, %arg6: memref<1x1x8x4xf32, #tpu.memory_space<vmem>>, %arg7: memref<1x8x9x4xf32, #tpu.memory_space<vmem>>, %arg8: memref<1x8x8x4xf32, #tpu.memory_space<vmem>>, %arg9: memref<9x4x128xf32, #tpu.memory_space<vmem>>, %arg10: memref<1x128xf32, #tpu.memory_space<vmem>>, %arg11: memref<1x8x8x128xf32, #tpu.memory_space<vmem>>) attributes {dimension_semantics = [#tpu.dimension_semantics<parallel>, #tpu.dimension_semantics<parallel>, #tpu.dimension_semantics<arbitrary>], iteration_bounds = array<i64: 2, 1, 1>, scalar_prefetch = 0 : i64, scratch_operands = 0 : i64, tpu.core_type = #tpu.core_type<tc>, window_params = [{transform_indices = @transform_0, window_bounds = array<i64: 1, 8, 9, 4>}, {transform_indices = @transform_1, window_bounds = array<i64: 1, 1, 9, 4>}, {transform_indices = @transform_2, window_bounds = array<i64: 1, 8, 8, 4>}, {transform_indices = @transform_3, window_bounds = array<i64: 1, 1, 8, 4>}, {transform_indices = @transform_4, window_bounds = array<i64: 1, 8, 9, 4>}, {transform_indices = @transform_5, window_bounds = array<i64: 1, 8, 8, 4>}, {transform_indices = @transform_6, window_bounds = array<i64: 9, 4, 128>}, {transform_indices = @transform_7, window_bounds = array<i64: 1, 128>}, {transform_indices = @transform_8, window_bounds = array<i64: 1, 8, 8, 128>}]} {
    %c0 = arith.constant 0 : index
    %c0_0 = arith.constant 0 : index
    %c0_1 = arith.constant 0 : index
    %c0_2 = arith.constant 0 : index
    %0 = vector.load %arg3[%c0, %c0_0, %c0_1, %c0_2] : memref<1x8x9x4xf32, #tpu.memory_space<vmem>>, vector<1x8x9x4xf32>
    %1 = vector.shape_cast %0 : vector<1x8x9x4xf32> to vector<8x9x4xf32>
    %c0_3 = arith.constant 0 : index
    %c0_4 = arith.constant 0 : index
    %c0_5 = arith.constant 0 : index
    %c0_6 = arith.constant 0 : index
    %2 = vector.load %arg4[%c0_3, %c0_4, %c0_5, %c0_6] : memref<1x1x9x4xf32, #tpu.memory_space<vmem>>, vector<1x1x9x4xf32>
    %3 = vector.shape_cast %2 : vector<1x1x9x4xf32> to vector<1x9x4xf32>
    %4 = tpu.concatenate %1, %3 in 0 : vector<8x9x4xf32>, vector<1x9x4xf32> -> vector<9x9x4xf32>
    %c0_7 = arith.constant 0 : index
    %c0_8 = arith.constant 0 : index
    %c0_9 = arith.constant 0 : index
    %c0_10 = arith.constant 0 : index
    %5 = vector.load %arg5[%c0_7, %c0_8, %c0_9, %c0_10] : memref<1x8x8x4xf32, #tpu.memory_space<vmem>>, vector<1x8x8x4xf32>
    %6 = vector.shape_cast %5 : vector<1x8x8x4xf32> to vector<8x8x4xf32>
    %c0_11 = arith.constant 0 : index
    %c0_12 = arith.constant 0 : index
    %c0_13 = arith.constant 0 : index
    %c0_14 = arith.constant 0 : index
    %7 = vector.load %arg6[%c0_11, %c0_12, %c0_13, %c0_14] : memref<1x1x8x4xf32, #tpu.memory_space<vmem>>, vector<1x1x8x4xf32>
    %8 = vector.shape_cast %7 : vector<1x1x8x4xf32> to vector<1x8x4xf32>
    %9 = tpu.concatenate %6, %8 in 0 : vector<8x8x4xf32>, vector<1x8x4xf32> -> vector<9x8x4xf32>
    %c0_15 = arith.constant 0 : index
    %c0_16 = arith.constant 0 : index
    %c0_17 = arith.constant 0 : index
    %c0_18 = arith.constant 0 : index
    %10 = vector.load %arg7[%c0_15, %c0_16, %c0_17, %c0_18] : memref<1x8x9x4xf32, #tpu.memory_space<vmem>>, vector<1x8x9x4xf32>
    %11 = vector.shape_cast %10 : vector<1x8x9x4xf32> to vector<8x9x4xf32>
    %c0_19 = arith.constant 0 : index
    %c0_20 = arith.constant 0 : index
    %c0_21 = arith.constant 0 : index
    %c0_22 = arith.constant 0 : index
    %12 = vector.load %arg8[%c0_19, %c0_20, %c0_21, %c0_22] : memref<1x8x8x4xf32, #tpu.memory_space<vmem>>, vector<1x8x8x4xf32>
    %13 = vector.shape_cast %12 : vector<1x8x8x4xf32> to vector<8x8x4xf32>
    %c0_23 = arith.constant 0 : index
    %c0_24 = arith.constant 0 : index
    %14 = vector.load %arg10[%c0_23, %c0_24] : memref<1x128xf32, #tpu.memory_space<vmem>>, vector<1x128xf32>
    %15 = vector.shape_cast %14 : vector<1x128xf32> to vector<1x128xf32>
    %16 = vector.broadcast %15 : vector<1x128xf32> to vector<64x128xf32>
    %17 = vector.extract_strided_slice %4 {offsets = [0, 0, 0], sizes = [8, 8, 4], strides = [1, 1, 1]} : vector<9x9x4xf32> to vector<8x8x4xf32>
    %18 = vector.shape_cast %17 : vector<8x8x4xf32> to vector<64x4xf32>
    %c0_25 = arith.constant 0 : index
    %c0_26 = arith.constant 0 : index
    %c0_27 = arith.constant 0 : index
    %19 = vector.load %arg9[%c0_25, %c0_26, %c0_27] : memref<9x4x128xf32, #tpu.memory_space<vmem>>, vector<1x4x128xf32>
    %20 = vector.shape_cast %19 : vector<1x4x128xf32> to vector<4x128xf32>
    %cst = arith.constant dense<0.000000e+00> : vector<64x128xf32>
    %21 = tpu.matmul %18, %20, %cst {dimension_numbers = #tpu.dot_dimension_numbers<[1], [0], [0], [1], [0, 0, 1, 1], [], []>} : vector<64x4xf32>, vector<4x128xf32>, vector<64x128xf32> -> vector<64x128xf32>
    %22 = arith.addf %16, %21 : vector<64x128xf32>
    %23 = vector.extract_strided_slice %9 {offsets = [0, 0, 0], sizes = [8, 8, 4], strides = [1, 1, 1]} : vector<9x8x4xf32> to vector<8x8x4xf32>
    %24 = vector.shape_cast %23 : vector<8x8x4xf32> to vector<64x4xf32>
    %c1 = arith.constant 1 : index
    %c0_28 = arith.constant 0 : index
    %c0_29 = arith.constant 0 : index
    %25 = vector.load %arg9[%c1, %c0_28, %c0_29] : memref<9x4x128xf32, #tpu.memory_space<vmem>>, vector<1x4x128xf32>
    %26 = vector.shape_cast %25 : vector<1x4x128xf32> to vector<4x128xf32>
    %cst_30 = arith.constant dense<0.000000e+00> : vector<64x128xf32>
    %27 = tpu.matmul %24, %26, %cst_30 {dimension_numbers = #tpu.dot_dimension_numbers<[1], [0], [0], [1], [0, 0, 1, 1], [], []>} : vector<64x4xf32>, vector<4x128xf32>, vector<64x128xf32> -> vector<64x128xf32>
    %28 = arith.addf %22, %27 : vector<64x128xf32>
    %29 = vector.extract_strided_slice %4 {offsets = [0, 1, 0], sizes = [8, 8, 4], strides = [1, 1, 1]} : vector<9x9x4xf32> to vector<8x8x4xf32>
    %30 = vector.shape_cast %29 : vector<8x8x4xf32> to vector<64x4xf32>
    %c2 = arith.constant 2 : index
    %c0_31 = arith.constant 0 : index
    %c0_32 = arith.constant 0 : index
    %31 = vector.load %arg9[%c2, %c0_31, %c0_32] : memref<9x4x128xf32, #tpu.memory_space<vmem>>, vector<1x4x128xf32>
    %32 = vector.shape_cast %31 : vector<1x4x128xf32> to vector<4x128xf32>
    %cst_33 = arith.constant dense<0.000000e+00> : vector<64x128xf32>
    %33 = tpu.matmul %30, %32, %cst_33 {dimension_numbers = #tpu.dot_dimension_numbers<[1], [0], [0], [1], [0, 0, 1, 1], [], []>} : vector<64x4xf32>, vector<4x128xf32>, vector<64x128xf32> -> vector<64x128xf32>
    %34 = arith.addf %28, %33 : vector<64x128xf32>
    %35 = vector.extract_strided_slice %11 {offsets = [0, 0, 0], sizes = [8, 8, 4], strides = [1, 1, 1]} : vector<8x9x4xf32> to vector<8x8x4xf32>
    %36 = vector.shape_cast %35 : vector<8x8x4xf32> to vector<64x4xf32>
    %c3 = arith.constant 3 : index
    %c0_34 = arith.constant 0 : index
    %c0_35 = arith.constant 0 : index
    %37 = vector.load %arg9[%c3, %c0_34, %c0_35] : memref<9x4x128xf32, #tpu.memory_space<vmem>>, vector<1x4x128xf32>
    %38 = vector.shape_cast %37 : vector<1x4x128xf32> to vector<4x128xf32>
    %cst_36 = arith.constant dense<0.000000e+00> : vector<64x128xf32>
    %39 = tpu.matmul %36, %38, %cst_36 {dimension_numbers = #tpu.dot_dimension_numbers<[1], [0], [0], [1], [0, 0, 1, 1], [], []>} : vector<64x4xf32>, vector<4x128xf32>, vector<64x128xf32> -> vector<64x128xf32>
    %40 = arith.addf %34, %39 : vector<64x128xf32>
    %41 = vector.shape_cast %13 : vector<8x8x4xf32> to vector<64x4xf32>
    %c4 = arith.constant 4 : index
    %c0_37 = arith.constant 0 : index
    %c0_38 = arith.constant 0 : index
    %42 = vector.load %arg9[%c4, %c0_37, %c0_38] : memref<9x4x128xf32, #tpu.memory_space<vmem>>, vector<1x4x128xf32>
    %43 = vector.shape_cast %42 : vector<1x4x128xf32> to vector<4x128xf32>
    %cst_39 = arith.constant dense<0.000000e+00> : vector<64x128xf32>
    %44 = tpu.matmul %41, %43, %cst_39 {dimension_numbers = #tpu.dot_dimension_numbers<[1], [0], [0], [1], [0, 0, 1, 1], [], []>} : vector<64x4xf32>, vector<4x128xf32>, vector<64x128xf32> -> vector<64x128xf32>
    %45 = arith.addf %40, %44 : vector<64x128xf32>
    %46 = vector.extract_strided_slice %11 {offsets = [0, 1, 0], sizes = [8, 8, 4], strides = [1, 1, 1]} : vector<8x9x4xf32> to vector<8x8x4xf32>
    %47 = vector.shape_cast %46 : vector<8x8x4xf32> to vector<64x4xf32>
    %c5 = arith.constant 5 : index
    %c0_40 = arith.constant 0 : index
    %c0_41 = arith.constant 0 : index
    %48 = vector.load %arg9[%c5, %c0_40, %c0_41] : memref<9x4x128xf32, #tpu.memory_space<vmem>>, vector<1x4x128xf32>
    %49 = vector.shape_cast %48 : vector<1x4x128xf32> to vector<4x128xf32>
    %cst_42 = arith.constant dense<0.000000e+00> : vector<64x128xf32>
    %50 = tpu.matmul %47, %49, %cst_42 {dimension_numbers = #tpu.dot_dimension_numbers<[1], [0], [0], [1], [0, 0, 1, 1], [], []>} : vector<64x4xf32>, vector<4x128xf32>, vector<64x128xf32> -> vector<64x128xf32>
    %51 = arith.addf %45, %50 : vector<64x128xf32>
    %52 = vector.extract_strided_slice %4 {offsets = [1, 0, 0], sizes = [8, 8, 4], strides = [1, 1, 1]} : vector<9x9x4xf32> to vector<8x8x4xf32>
    %53 = vector.shape_cast %52 : vector<8x8x4xf32> to vector<64x4xf32>
    %c6 = arith.constant 6 : index
    %c0_43 = arith.constant 0 : index
    %c0_44 = arith.constant 0 : index
    %54 = vector.load %arg9[%c6, %c0_43, %c0_44] : memref<9x4x128xf32, #tpu.memory_space<vmem>>, vector<1x4x128xf32>
    %55 = vector.shape_cast %54 : vector<1x4x128xf32> to vector<4x128xf32>
    %cst_45 = arith.constant dense<0.000000e+00> : vector<64x128xf32>
    %56 = tpu.matmul %53, %55, %cst_45 {dimension_numbers = #tpu.dot_dimension_numbers<[1], [0], [0], [1], [0, 0, 1, 1], [], []>} : vector<64x4xf32>, vector<4x128xf32>, vector<64x128xf32> -> vector<64x128xf32>
    %57 = arith.addf %51, %56 : vector<64x128xf32>
    %58 = vector.extract_strided_slice %9 {offsets = [1, 0, 0], sizes = [8, 8, 4], strides = [1, 1, 1]} : vector<9x8x4xf32> to vector<8x8x4xf32>
    %59 = vector.shape_cast %58 : vector<8x8x4xf32> to vector<64x4xf32>
    %c7 = arith.constant 7 : index
    %c0_46 = arith.constant 0 : index
    %c0_47 = arith.constant 0 : index
    %60 = vector.load %arg9[%c7, %c0_46, %c0_47] : memref<9x4x128xf32, #tpu.memory_space<vmem>>, vector<1x4x128xf32>
    %61 = vector.shape_cast %60 : vector<1x4x128xf32> to vector<4x128xf32>
    %cst_48 = arith.constant dense<0.000000e+00> : vector<64x128xf32>
    %62 = tpu.matmul %59, %61, %cst_48 {dimension_numbers = #tpu.dot_dimension_numbers<[1], [0], [0], [1], [0, 0, 1, 1], [], []>} : vector<64x4xf32>, vector<4x128xf32>, vector<64x128xf32> -> vector<64x128xf32>
    %63 = arith.addf %57, %62 : vector<64x128xf32>
    %64 = vector.extract_strided_slice %4 {offsets = [1, 1, 0], sizes = [8, 8, 4], strides = [1, 1, 1]} : vector<9x9x4xf32> to vector<8x8x4xf32>
    %65 = vector.shape_cast %64 : vector<8x8x4xf32> to vector<64x4xf32>
    %c8 = arith.constant 8 : index
    %c0_49 = arith.constant 0 : index
    %c0_50 = arith.constant 0 : index
    %66 = vector.load %arg9[%c8, %c0_49, %c0_50] : memref<9x4x128xf32, #tpu.memory_space<vmem>>, vector<1x4x128xf32>
    %67 = vector.shape_cast %66 : vector<1x4x128xf32> to vector<4x128xf32>
    %cst_51 = arith.constant dense<0.000000e+00> : vector<64x128xf32>
    %68 = tpu.matmul %65, %67, %cst_51 {dimension_numbers = #tpu.dot_dimension_numbers<[1], [0], [0], [1], [0, 0, 1, 1], [], []>} : vector<64x4xf32>, vector<4x128xf32>, vector<64x128xf32> -> vector<64x128xf32>
    %69 = arith.addf %63, %68 : vector<64x128xf32>
    %70 = vector.shape_cast %69 : vector<64x128xf32> to vector<1x8x8x128xf32>
    %c0_52 = arith.constant 0 : index
    %c0_53 = arith.constant 0 : index
    %c0_54 = arith.constant 0 : index
    %c0_55 = arith.constant 0 : index
    %71 = vector.load %arg11[%c0_52, %c0_53, %c0_54, %c0_55] : memref<1x8x8x128xf32, #tpu.memory_space<vmem>>, vector<1x8x8x128xf32>
    tpu.vector_store %arg11[%c0_52, %c0_53, %c0_54, %c0_55], %70 {strides = array<i32>} : memref<1x8x8x128xf32, #tpu.memory_space<vmem>>, vector<1x8x8x128xf32>,
    return
  }
  func.func @transform_0(%arg0: i32, %arg1: i32, %arg2: i32) -> (i32, i32, i32, i32) {
    %c0_i32 = arith.constant 0 : i32
    %c0_i32_0 = arith.constant 0 : i32
    %c0_i32_1 = arith.constant 0 : i32
    return %arg0, %arg1, %c0_i32, %c0_i32_0 : i32, i32, i32, i32
  }
  func.func @transform_1(%arg0: i32, %arg1: i32, %arg2: i32) -> (i32, i32, i32, i32) {
    %c1_i32 = arith.constant 1 : i32
    %0 = arith.addi %arg1, %c1_i32 : i32
    %c8_i32 = arith.constant 8 : i32
    %1 = arith.muli %0, %c8_i32 : i32
    %c8_i32_0 = arith.constant 8 : i32
    %2 = arith.minsi %1, %c8_i32_0 : i32
    %c0_i32 = arith.constant 0 : i32
    %c0_i32_1 = arith.constant 0 : i32
    %c0_i32_2 = arith.constant 0 : i32
    return %arg0, %2, %c0_i32, %c0_i32_1 : i32, i32, i32, i32
  }
  func.func @transform_2(%arg0: i32, %arg1: i32, %arg2: i32) -> (i32, i32, i32, i32) {
    %c0_i32 = arith.constant 0 : i32
    %c0_i32_0 = arith.constant 0 : i32
    %c0_i32_1 = arith.constant 0 : i32
    return %arg0, %arg1, %c0_i32, %c0_i32_0 : i32, i32, i32, i32
  }
  func.func @transform_3(%arg0: i32, %arg1: i32, %arg2: i32) -> (i32, i32, i32, i32) {
    %c1_i32 = arith.constant 1 : i32
    %0 = arith.addi %arg1, %c1_i32 : i32
    %c8_i32 = arith.constant 8 : i32
    %1 = arith.muli %0, %c8_i32 : i32
    %c8_i32_0 = arith.constant 8 : i32
    %2 = arith.minsi %1, %c8_i32_0 : i32
    %c0_i32 = arith.constant 0 : i32
    %c0_i32_1 = arith.constant 0 : i32
    %c0_i32_2 = arith.constant 0 : i32
    return %arg0, %2, %c0_i32, %c0_i32_1 : i32, i32, i32, i32
  }
  func.func @transform_4(%arg0: i32, %arg1: i32, %arg2: i32) -> (i32, i32, i32, i32) {
    %c0_i32 = arith.constant 0 : i32
    %c0_i32_0 = arith.constant 0 : i32
    %c0_i32_1 = arith.constant 0 : i32
    return %arg0, %arg1, %c0_i32, %c0_i32_0 : i32, i32, i32, i32
  }
  func.func @transform_5(%arg0: i32, %arg1: i32, %arg2: i32) -> (i32, i32, i32, i32) {
    %c0_i32 = arith.constant 0 : i32
    %c0_i32_0 = arith.constant 0 : i32
    %c0_i32_1 = arith.constant 0 : i32
    return %arg0, %arg1, %c0_i32, %c0_i32_0 : i32, i32, i32, i32
  }
  func.func @transform_6(%arg0: i32, %arg1: i32, %arg2: i32) -> (i32, i32, i32) {
    %c0_i32 = arith.constant 0 : i32
    %c0_i32_0 = arith.constant 0 : i32
    %c0_i32_1 = arith.constant 0 : i32
    return %c0_i32, %c0_i32_0, %arg2 : i32, i32, i32
  }
  func.func @transform_7(%arg0: i32, %arg1: i32, %arg2: i32) -> (i32, i32) {
    %c0_i32 = arith.constant 0 : i32
    %c0_i32_0 = arith.constant 0 : i32
    return %c0_i32, %arg2 : i32, i32
  }
  func.func @transform_8(%arg0: i32, %arg1: i32, %arg2: i32) -> (i32, i32, i32, i32) {
    %c0_i32 = arith.constant 0 : i32
    %c0_i32_0 = arith.constant 0 : i32
    return %arg0, %arg1, %c0_i32, %arg2 : i32, i32, i32, i32
  }
}

</mosaic_0001>

<llo_original>
// kernel: tpu_custom_call.1
$region0: #{tpu_custom_call.1}
  #allocation0 [shape = 'u32[]', space=smem, size = 0x4, offset = 0x4, fixed_abs, tag = 'smem constant byte address 0x4 - core index']
  #allocation1 [shape = 'u32[72,128]{1,0:T(1,128)}', space=vmem, size = 0x9000, scoped, tag = 'internal scratch']
  %s0 = inlined_call_operand.vmem [shape: f32[2,9,9,4], index: 0, kind: input, shape index: {}]
  %s1 = inlined_call_operand.vmem [shape: f32[2,9,9,4], index: 1, kind: input, shape index: {}]
  %s2 = inlined_call_operand.vmem [shape: f32[2,9,8,4], index: 2, kind: input, shape index: {}]
  %s3 = inlined_call_operand.vmem [shape: f32[2,9,8,4], index: 3, kind: input, shape index: {}]
  %s4 = inlined_call_operand.vmem [shape: f32[2,8,9,4], index: 4, kind: input, shape index: {}]
  %s5 = inlined_call_operand.vmem [shape: f32[2,8,8,4], index: 5, kind: input, shape index: {}]
  %s6 = inlined_call_operand.vmem [shape: f32[9,4,128], index: 6, kind: input, shape index: {}]
  %s7 = inlined_call_operand.vmem [shape: f32[1,128], index: 7, kind: input, shape index: {}]
  %s8 = inlined_call_operand.hbm [shape: f32[2,8,8,128], index: 8, kind: output, shape index: {}]
  %s9 = sld [smem:[#allocation0]]
  $region65: #{tpu_custom_call.1} parent=0
    _
  %s11 = ssub.s32 1, %s9
  %s12 = scalar_select 0, %s11, %s9
  $region1: #{tpu_custom_call.1} parent=0
    #allocation2 [shape = 'u8[65536]{0}', space=vmem, size = 0x10000, scoped, tag = 'output window, operand 0']
    #allocation3 [shape = 's32[2]{0}', space=sflag, size = 0x8, scoped, tag = 'scoped memory for tpu_custom_call.1']
    %13 = vsyncpa [#allocation3], 0
    %s14 = scalar_lea.sflag [#allocation3], 1
    %15 = vsyncpa %s14, 0
    loop: start=0, step=1, limit=4
    $region2: #{tpu_custom_call.1} parent=1 // loop_pre_header
      _
    $region3: #{tpu_custom_call.1} parent=1 // loop_header
      %s17 = sphi 0, %s21
      %p18 = scmp.ge.s32.totalorder %s17, 4
      %s24 = sphi 0, %s43
      %s25 = sphi 0, %s39
      %s26 = sphi 0, %s35
      %s27 = sphi 0, %s24
      %s28 = sphi 0, %s25
      %s29 = sphi 0, %s26
      %s30 = sphi 0, %s27
      %s31 = sphi 0, %s28
      %s32 = sphi 0, %s29
      %s48 = sphi 0, %s50
      %s51 = sphi 0, %s48
      %s52 = sphi 0, %s51
      %s68 = sphi 0, %s52
      %s84 = sphi 0, %s86
      %s87 = sphi 0, %s84
      %s88 = sphi 0, %s87
      %s104 = sphi 0, %s88
      %s112 = sphi 0, %s114
      %s115 = sphi 0, %s112
      %s116 = sphi 0, %s115
      %s132 = sphi 0, %s116
      %s148 = sphi 0, %s150
      %s151 = sphi 0, %s148
      %s152 = sphi 0, %s151
      %s168 = sphi 0, %s152
      %s176 = sphi 0, %s178
      %s179 = sphi 0, %s176
      %s180 = sphi 0, %s179
      %s196 = sphi 0, %s180
      %s204 = sphi 0, %s206
      %s207 = sphi 0, %s204
      %s208 = sphi 0, %s207
      %s224 = sphi 0, %s208
      %s230 = sphi 0, %s232
      %s233 = sphi 0, %s230
      %s234 = sphi 0, %s233
      %s250 = sphi 0, %s234
      %s256 = sphi 0, %s258
      %s259 = sphi 0, %s256
      %s260 = sphi 0, %s259
      %s276 = sphi 0, %s260
      %s286 = sphi 0, %s288
      %s289 = sphi 0, %s286
      %s290 = sphi 0, %s289
      %s306 = sphi 0, %s290
    $region4: #{tpu_custom_call.1} parent=1 // loop_header_branch
      %20 = sbr.rel (%p18) target = $region8
    $region5: #{tpu_custom_call.1} parent=1 // loop_body
      %s22 = ssub.s32 %s17, 1
      %s23 = ssub.s32 %s17, 2
      %s33 = sadd.s32 1, %s26
      %p34 = scmp.ge.s32.totalorder %s33, 1
      %s35 = scalar_select %p34, 0, %s33
      %s36 = sadd.s32 1, %s25
      %s37 = scalar_select %p34, %s36, %s25
      %p38 = scmp.ge.s32.totalorder %s37, 1
      %s39 = scalar_select %p38, 0, %s37
      %s40 = sadd.s32 1, %s24
      %s41 = scalar_select %p38, %s40, %s24
      %p42 = scmp.ge.s32.totalorder %s41, 2
      %s43 = scalar_select %p42, 0, %s41
      %s44 = ssub.s32 %s24, %s43
      %s45 = ssub.s32 %s25, %s39
      %s46 = sor.u32 %s44, %s45
      %p47 = scmp.eq.s32.totalorder %s46, 0
      %s49 = sadd.s32 %s48, 1
      %s50 = scalar_select %p47, %s48, %s49
      %p53 = pneg %p47
      %p54 = scmp.eq.s32.totalorder %s17, 1
      %p55 = por %p53, %p54
      %p56 = scmp.ne.s32.totalorder %s48, %s51
      %p57 = scmp.eq.s32.totalorder %s17, 0
      %p58 = por %p56, %p57
      %p59 = scmp.ne.s32.totalorder %s48, %s51
      %p60 = scmp.eq.s32.totalorder %s22, 1
      %p61 = por %p59, %p60
      %p62 = scmp.ne.s32.totalorder %s51, %s52
      %p63 = scmp.eq.s32.totalorder %s22, 0
      %p64 = por %p62, %p63
      %p65 = scmp.ne.s32.totalorder %s51, %s52
      %p66 = scmp.eq.s32.totalorder %s23, 1
      %p67 = por %p65, %p66
      %p69 = scmp.ne.s32.totalorder %s52, %s68
      %p70 = scmp.eq.s32.totalorder %s23, 0
      %p71 = por %p69, %p70
      %s72 = sadd.s32 %s25, 1
      %s73 = smul.u32 %s72, 8
      %p74 = scmp.lt.s32.totalorder %s73, 8
      %s75 = scalar_select %p74, %s73, 8
      %s76 = sadd.s32 %s39, 1
      %s77 = smul.u32 %s76, 8
      %p78 = scmp.lt.s32.totalorder %s77, 8
      %s79 = scalar_select %p78, %s77, 8
      %s80 = ssub.s32 %s24, %s43
      %s81 = ssub.s32 %s75, %s79
      %s82 = sor.u32 %s80, %s81
      %p83 = scmp.eq.s32.totalorder %s82, 0
      %s85 = sadd.s32 %s84, 1
      %s86 = scalar_select %p83, %s84, %s85
      %p89 = pneg %p83
      %p90 = scmp.eq.s32.totalorder %s17, 1
      %p91 = por %p89, %p90
      %p92 = scmp.ne.s32.totalorder %s84, %s87
      %p93 = scmp.eq.s32.totalorder %s17, 0
      %p94 = por %p92, %p93
      %p95 = scmp.ne.s32.totalorder %s84, %s87
      %p96 = scmp.eq.s32.totalorder %s22, 1
      %p97 = por %p95, %p96
      %p98 = scmp.ne.s32.totalorder %s87, %s88
      %p99 = scmp.eq.s32.totalorder %s22, 0
      %p100 = por %p98, %p99
      %p101 = scmp.ne.s32.totalorder %s87, %s88
      %p102 = scmp.eq.s32.totalorder %s23, 1
      %p103 = por %p101, %p102
      %p105 = scmp.ne.s32.totalorder %s88, %s104
      %p106 = scmp.eq.s32.totalorder %s23, 0
      %p107 = por %p105, %p106
      %s108 = ssub.s32 %s24, %s43
      %s109 = ssub.s32 %s25, %s39
      %s110 = sor.u32 %s108, %s109
      %p111 = scmp.eq.s32.totalorder %s110, 0
      %s113 = sadd.s32 %s112, 1
      %s114 = scalar_select %p111, %s112, %s113
      %p117 = pneg %p111
      %p118 = scmp.eq.s32.totalorder %s17, 1
      %p119 = por %p117, %p118
      %p120 = scmp.ne.s32.totalorder %s112, %s115
      %p121 = scmp.eq.s32.totalorder %s17, 0
      %p122 = por %p120, %p121
      %p123 = scmp.ne.s32.totalorder %s112, %s115
      %p124 = scmp.eq.s32.totalorder %s22, 1
      %p125 = por %p123, %p124
      %p126 = scmp.ne.s32.totalorder %s115, %s116
      %p127 = scmp.eq.s32.totalorder %s22, 0
      %p128 = por %p126, %p127
      %p129 = scmp.ne.s32.totalorder %s115, %s116
      %p130 = scmp.eq.s32.totalorder %s23, 1
      %p131 = por %p129, %p130
      %p133 = scmp.ne.s32.totalorder %s116, %s132
      %p134 = scmp.eq.s32.totalorder %s23, 0
      %p135 = por %p133, %p134
      %s136 = sadd.s32 %s25, 1
      %s137 = smul.u32 %s136, 8
      %p138 = scmp.lt.s32.totalorder %s137, 8
      %s139 = scalar_select %p138, %s137, 8
      %s140 = sadd.s32 %s39, 1
      %s141 = smul.u32 %s140, 8
      %p142 = scmp.lt.s32.totalorder %s141, 8
      %s143 = scalar_select %p142, %s141, 8
      %s144 = ssub.s32 %s24, %s43
      %s145 = ssub.s32 %s139, %s143
      %s146 = sor.u32 %s144, %s145
      %p147 = scmp.eq.s32.totalorder %s146, 0
      %s149 = sadd.s32 %s148, 1
      %s150 = scalar_select %p147, %s148, %s149
      %p153 = pneg %p147
      %p154 = scmp.eq.s32.totalorder %s17, 1
      %p155 = por %p153, %p154
      %p156 = scmp.ne.s32.totalorder %s148, %s151
      %p157 = scmp.eq.s32.totalorder %s17, 0
      %p158 = por %p156, %p157
      %p159 = scmp.ne.s32.totalorder %s148, %s151
      %p160 = scmp.eq.s32.totalorder %s22, 1
      %p161 = por %p159, %p160
      %p162 = scmp.ne.s32.totalorder %s151, %s152
      %p163 = scmp.eq.s32.totalorder %s22, 0
      %p164 = por %p162, %p163
      %p165 = scmp.ne.s32.totalorder %s151, %s152
      %p166 = scmp.eq.s32.totalorder %s23, 1
      %p167 = por %p165, %p166
      %p169 = scmp.ne.s32.totalorder %s152, %s168
      %p170 = scmp.eq.s32.totalorder %s23, 0
      %p171 = por %p169, %p170
      %s172 = ssub.s32 %s24, %s43
      %s173 = ssub.s32 %s25, %s39
      %s174 = sor.u32 %s172, %s173
      %p175 = scmp.eq.s32.totalorder %s174, 0
      %s177 = sadd.s32 %s176, 1
      %s178 = scalar_select %p175, %s176, %s177
      %p181 = pneg %p175
      %p182 = scmp.eq.s32.totalorder %s17, 1
      %p183 = por %p181, %p182
      %p184 = scmp.ne.s32.totalorder %s176, %s179
      %p185 = scmp.eq.s32.totalorder %s17, 0
      %p186 = por %p184, %p185
      %p187 = scmp.ne.s32.totalorder %s176, %s179
      %p188 = scmp.eq.s32.totalorder %s22, 1
      %p189 = por %p187, %p188
      %p190 = scmp.ne.s32.totalorder %s179, %s180
      %p191 = scmp.eq.s32.totalorder %s22, 0
      %p192 = por %p190, %p191
      %p193 = scmp.ne.s32.totalorder %s179, %s180
      %p194 = scmp.eq.s32.totalorder %s23, 1
      %p195 = por %p193, %p194
      %p197 = scmp.ne.s32.totalorder %s180, %s196
      %p198 = scmp.eq.s32.totalorder %s23, 0
      %p199 = por %p197, %p198
      %s200 = ssub.s32 %s24, %s43
      %s201 = ssub.s32 %s25, %s39
      %s202 = sor.u32 %s200, %s201
      %p203 = scmp.eq.s32.totalorder %s202, 0
      %s205 = sadd.s32 %s204, 1
      %s206 = scalar_select %p203, %s204, %s205
      %p209 = pneg %p203
      %p210 = scmp.eq.s32.totalorder %s17, 1
      %p211 = por %p209, %p210
      %p212 = scmp.ne.s32.totalorder %s204, %s207
      %p213 = scmp.eq.s32.totalorder %s17, 0
      %p214 = por %p212, %p213
      %p215 = scmp.ne.s32.totalorder %s204, %s207
      %p216 = scmp.eq.s32.totalorder %s22, 1
      %p217 = por %p215, %p216
      %p218 = scmp.ne.s32.totalorder %s207, %s208
      %p219 = scmp.eq.s32.totalorder %s22, 0
      %p220 = por %p218, %p219
      %p221 = scmp.ne.s32.totalorder %s207, %s208
      %p222 = scmp.eq.s32.totalorder %s23, 1
      %p223 = por %p221, %p222
      %p225 = scmp.ne.s32.totalorder %s208, %s224
      %p226 = scmp.eq.s32.totalorder %s23, 0
      %p227 = por %p225, %p226
      %s228 = ssub.s32 %s26, %s35
      %p229 = scmp.eq.s32.totalorder %s228, 0
      %s231 = sadd.s32 %s230, 1
      %s232 = scalar_select %p229, %s230, %s231
      %p235 = pneg %p229
      %p236 = scmp.eq.s32.totalorder %s17, 1
      %p237 = por %p235, %p236
      %p238 = scmp.ne.s32.totalorder %s230, %s233
      %p239 = scmp.eq.s32.totalorder %s17, 0
      %p240 = por %p238, %p239
      %p241 = scmp.ne.s32.totalorder %s230, %s233
      %p242 = scmp.eq.s32.totalorder %s22, 1
      %p243 = por %p241, %p242
      %p244 = scmp.ne.s32.totalorder %s233, %s234
      %p245 = scmp.eq.s32.totalorder %s22, 0
      %p246 = por %p244, %p245
      %p247 = scmp.ne.s32.totalorder %s233, %s234
      %p248 = scmp.eq.s32.totalorder %s23, 1
      %p249 = por %p247, %p248
      %p251 = scmp.ne.s32.totalorder %s234, %s250
      %p252 = scmp.eq.s32.totalorder %s23, 0
      %p253 = por %p251, %p252
      %s254 = ssub.s32 %s26, %s35
      %p255 = scmp.eq.s32.totalorder %s254, 0
      %s257 = sadd.s32 %s256, 1
      %s258 = scalar_select %p255, %s256, %s257
      %p261 = pneg %p255
      %p262 = scmp.eq.s32.totalorder %s17, 1
      %p263 = por %p261, %p262
      %p264 = scmp.ne.s32.totalorder %s256, %s259
      %p265 = scmp.eq.s32.totalorder %s17, 0
      %p266 = por %p264, %p265
      %p267 = scmp.ne.s32.totalorder %s256, %s259
      %p268 = scmp.eq.s32.totalorder %s22, 1
      %p269 = por %p267, %p268
      %p270 = scmp.ne.s32.totalorder %s259, %s260
      %p271 = scmp.eq.s32.totalorder %s22, 0
      %p272 = por %p270, %p271
      %p273 = scmp.ne.s32.totalorder %s259, %s260
      %p274 = scmp.eq.s32.totalorder %s23, 1
      %p275 = por %p273, %p274
      %p277 = scmp.ne.s32.totalorder %s260, %s276
      %p278 = scmp.eq.s32.totalorder %s23, 0
      %p279 = por %p277, %p278
      %s280 = ssub.s32 %s24, %s43
      %s281 = ssub.s32 %s25, %s39
      %s282 = sor.u32 %s280, %s281
      %s283 = ssub.s32 %s26, %s35
      %s284 = sor.u32 %s282, %s283
      %p285 = scmp.eq.s32.totalorder %s284, 0
      %s287 = sadd.s32 %s286, 1
      %s288 = scalar_select %p285, %s286, %s287
      %p291 = pneg %p285
      %p292 = scmp.eq.s32.totalorder %s17, 1
      %p293 = por %p291, %p292
      %p294 = scmp.ne.s32.totalorder %s286, %s289
      %p295 = scmp.eq.s32.totalorder %s17, 0
      %p296 = por %p294, %p295
      %p297 = scmp.ne.s32.totalorder %s286, %s289
      %p298 = scmp.eq.s32.totalorder %s22, 1
      %p299 = por %p297, %p298
      %p300 = scmp.ne.s32.totalorder %s289, %s290
      %p301 = scmp.eq.s32.totalorder %s22, 0
      %p302 = por %p300, %p301
      %p303 = scmp.ne.s32.totalorder %s289, %s290
      %p304 = scmp.eq.s32.totalorder %s23, 1
      %p305 = por %p303, %p304
      %p307 = scmp.ne.s32.totalorder %s290, %s306
      %p308 = scmp.eq.s32.totalorder %s23, 0
      %p309 = por %p307, %p308
      %p310 = scmp.le.s32.totalorder 1, %s17
      %p311 = scmp.lt.s32.totalorder %s17, 3
      %p312 = pnand %p310, %p311
      %p313 = pneg %p312
      // Predicated region
      $region9: #{tpu_custom_call.1} parent=5 // pred_check
        _
      $region10: #{tpu_custom_call.1} parent=5 // pred_check_branch
        %315 = sbr.rel (%p312) target = $region12
      $region11: #{tpu_custom_call.1} parent=5 // pred_region
        %s316 = ssub.s32 %s17, 1
        // Predicated region
        $region13: #{tpu_custom_call.1} parent=11 // pred_check
          %p317 = pneg %p246
        $region14: #{tpu_custom_call.1} parent=11 // pred_check_branch
          %319 = sbr.rel (%p317) target = $region16
        $region15: #{tpu_custom_call.1} parent=11 // pred_region
          %p320 = scmp.lt.s32.totalorder %s29, 0
          %s321 = scalar_select %p320, %s29, 0
          %s322 = smul.addr %s321, 4
          %s323 = scalar_lea.vmem %s6, %s322
        $region16: #{tpu_custom_call.1} parent=11 // pred_fallthru
          _
        // Predicated region
        $region17: #{tpu_custom_call.1} parent=11 // pred_check
          %p324 = pneg %p272
        $region18: #{tpu_custom_call.1} parent=11 // pred_check_branch
          %326 = sbr.rel (%p324) target = $region20
        $region19: #{tpu_custom_call.1} parent=11 // pred_region
          %p327 = scmp.lt.s32.totalorder %s29, 0
          %s328 = scalar_select %p327, %s29, 0
          %s329 = scalar_lea.vmem %s7, %s328
        $region20: #{tpu_custom_call.1} parent=11 // pred_fallthru
          _
      $region12: #{tpu_custom_call.1} parent=5 // pred_fallthru
        _
      %p330 = scmp.lt.s32.totalorder %s17, 2
      // Predicated region
      $region21: #{tpu_custom_call.1} parent=5 // pred_check
        %p331 = pneg %p330
      $region22: #{tpu_custom_call.1} parent=5 // pred_check_branch
        %333 = sbr.rel (%p331) target = $region24
      $region23: #{tpu_custom_call.1} parent=5 // pred_region
        // Predicated region
        $region25: #{tpu_custom_call.1} parent=23 // pred_check
          %p334 = pneg %p58
        $region26: #{tpu_custom_call.1} parent=23 // pred_check_branch
          %336 = sbr.rel (%p334) target = $region28
        $region27: #{tpu_custom_call.1} parent=23 // pred_region
          %s337 = smul.u32 8, %s25
          %s338 = ssub.s32 9, %s337
          %p339 = scmp.lt.s32.totalorder %s338, 8
          %s340 = scalar_select %p339, %s338, 8
          %s341 = smul.u32 8, %s340
          %s342 = smul.u32 %s341, 2
          %p343 = scmp.lt.s32.totalorder %s24, 1
          %s344 = scalar_select %p343, %s24, 1
          %p345 = scmp.lt.s32.totalorder %s337, 8
          %s346 = scalar_select %p345, %s337, 8
          %s347 = smul.addr %s346, 2
          %s348 = smul.addr %s344, 18
          %s349 = sadd.s32 %s347, %s348
          %s350 = smul.addr %s349, 8
          %s351 = scalar_lea.vmem %s0, %s350
          %s352 = smul.u32 8, %s25
          %s353 = ssub.s32 9, %s352
          %p354 = scmp.lt.s32.totalorder %s353, 8
          %s355 = scalar_select %p354, %s353, 8
          %s356 = smul.u32 8, %s355
          %s357 = smul.u32 %s356, 2
        $region28: #{tpu_custom_call.1} parent=23 // pred_fallthru
          _
        // Predicated region
        $region29: #{tpu_custom_call.1} parent=23 // pred_check
          %p358 = pneg %p94
        $region30: #{tpu_custom_call.1} parent=23 // pred_check_branch
          %360 = sbr.rel (%p358) target = $region32
        $region31: #{tpu_custom_call.1} parent=23 // pred_region
          %s361 = sadd.s32 %s25, 1
          %s362 = smul.u32 %s361, 8
          %p363 = scmp.lt.s32.totalorder %s362, 8
          %s364 = scalar_select %p363, %s362, 8
          %p365 = scmp.lt.s32.totalorder %s24, 1
          %s366 = scalar_select %p365, %s24, 1
          %p367 = scmp.lt.s32.totalorder %s364, 8
          %s368 = scalar_select %p367, %s364, 8
          %s369 = smul.addr %s368, 2
          %s370 = smul.addr %s366, 18
          %s371 = sadd.s32 %s369, %s370
          %s372 = smul.addr %s371, 8
          %s373 = scalar_lea.vmem %s1, %s372
          %s374 = sadd.s32 %s25, 1
          %s375 = smul.u32 %s374, 8
          %p376 = scmp.lt.s32.totalorder %s375, 8
          %s377 = scalar_select %p376, %s375, 8
        $region32: #{tpu_custom_call.1} parent=23 // pred_fallthru
          _
        // Predicated region
        $region33: #{tpu_custom_call.1} parent=23 // pred_check
          %p378 = pneg %p122
        $region34: #{tpu_custom_call.1} parent=23 // pred_check_branch
          %380 = sbr.rel (%p378) target = $region36
        $region35: #{tpu_custom_call.1} parent=23 // pred_region
          %s381 = smul.u32 8, %s25
          %s382 = ssub.s32 9, %s381
          %p383 = scmp.lt.s32.totalorder %s382, 8
          %s384 = scalar_select %p383, %s382, 8
          %s385 = smul.u32 8, %s384
          %p386 = scmp.lt.s32.totalorder %s24, 1
          %s387 = scalar_select %p386, %s24, 1
          %p388 = scmp.lt.s32.totalorder %s381, 8
          %s389 = scalar_select %p388, %s381, 8
          %s390 = smul.addr %s387, 9
          %s391 = sadd.s32 %s389, %s390
          %s392 = smul.addr %s391, 8
          %s393 = scalar_lea.vmem %s2, %s392
          %s394 = smul.u32 8, %s25
          %s395 = ssub.s32 9, %s394
          %p396 = scmp.lt.s32.totalorder %s395, 8
          %s397 = scalar_select %p396, %s395, 8
          %s398 = smul.u32 8, %s397
        $region36: #{tpu_custom_call.1} parent=23 // pred_fallthru
          _
        // Predicated region
        $region37: #{tpu_custom_call.1} parent=23 // pred_check
          %p399 = pneg %p158
        $region38: #{tpu_custom_call.1} parent=23 // pred_check_branch
          %401 = sbr.rel (%p399) target = $region40
        $region39: #{tpu_custom_call.1} parent=23 // pred_region
          %s402 = sadd.s32 %s25, 1
          %s403 = smul.u32 %s402, 8
          %p404 = scmp.lt.s32.totalorder %s403, 8
          %s405 = scalar_select %p404, %s403, 8
          %p406 = scmp.lt.s32.totalorder %s24, 1
          %s407 = scalar_select %p406, %s24, 1
          %p408 = scmp.lt.s32.totalorder %s405, 8
          %s409 = scalar_select %p408, %s405, 8
          %s410 = smul.addr %s407, 9
          %s411 = sadd.s32 %s409, %s410
          %s412 = smul.addr %s411, 8
          %s413 = scalar_lea.vmem %s3, %s412
          %s414 = sadd.s32 %s25, 1
          %s415 = smul.u32 %s414, 8
          %p416 = scmp.lt.s32.totalorder %s415, 8
          %s417 = scalar_select %p416, %s415, 8
        $region40: #{tpu_custom_call.1} parent=23 // pred_fallthru
          _
        // Predicated region
        $region41: #{tpu_custom_call.1} parent=23 // pred_check
          %p418 = pneg %p186
        $region42: #{tpu_custom_call.1} parent=23 // pred_check_branch
          %420 = sbr.rel (%p418) target = $region44
        $region43: #{tpu_custom_call.1} parent=23 // pred_region
          %s421 = smul.u32 8, %s25
          %p422 = scmp.lt.s32.totalorder %s24, 1
          %s423 = scalar_select %p422, %s24, 1
          %p424 = scmp.lt.s32.totalorder %s421, 7
          %s425 = scalar_select %p424, %s421, 7
          %s426 = smul.addr %s425, 2
          %s427 = smul.addr %s423, 16
          %s428 = sadd.s32 %s426, %s427
          %s429 = smul.addr %s428, 8
          %s430 = scalar_lea.vmem %s4, %s429
          %s431 = smul.u32 8, %s25
        $region44: #{tpu_custom_call.1} parent=23 // pred_fallthru
          _
        // Predicated region
        $region45: #{tpu_custom_call.1} parent=23 // pred_check
          %p432 = pneg %p214
        $region46: #{tpu_custom_call.1} parent=23 // pred_check_branch
          %434 = sbr.rel (%p432) target = $region48
        $region47: #{tpu_custom_call.1} parent=23 // pred_region
          %s435 = smul.u32 8, %s25
          %p436 = scmp.lt.s32.totalorder %s24, 1
          %s437 = scalar_select %p436, %s24, 1
          %p438 = scmp.lt.s32.totalorder %s435, 7
          %s439 = scalar_select %p438, %s435, 7
          %s440 = smul.addr %s437, 8
          %s441 = sadd.s32 %s439, %s440
          %s442 = smul.addr %s441, 8
          %s443 = scalar_lea.vmem %s5, %s442
          %s444 = smul.u32 8, %s25
        $region48: #{tpu_custom_call.1} parent=23 // pred_fallthru
          _
      $region24: #{tpu_custom_call.1} parent=5 // pred_fallthru
        _
      %p445 = scmp.le.s32.totalorder 1, %s17
      %p446 = scmp.lt.s32.totalorder %s17, 3
      %p447 = pnand %p445, %p446
      %p448 = pneg %p447
      // Predicated region
      $region49: #{tpu_custom_call.1} parent=5 // pred_check
        _
      $region50: #{tpu_custom_call.1} parent=5 // pred_check_branch
        %450 = sbr.rel (%p447) target = $region52
      $region51: #{tpu_custom_call.1} parent=5 // pred_region
        %s451 = ssub.s32 %s17, 1
        %s452 = smul.u32 8, %s28
        %s453 = ssub.s32 9, %s452
        %p454 = scmp.lt.s32.totalorder %s453, 8
        %s455 = scalar_select %p454, %s453, 8
        %s456 = smul.u32 8, %s455
        %s457 = smul.u32 %s456, 2
        %p458 = scmp.lt.s32.totalorder %s27, 1
        %s459 = scalar_select %p458, %s27, 1
        %p460 = scmp.lt.s32.totalorder %s452, 8
        %s461 = scalar_select %p460, %s452, 8
        %s462 = smul.addr %s461, 2
        %s463 = smul.addr %s459, 18
        %s464 = sadd.s32 %s462, %s463
        %s465 = smul.addr %s464, 8
        %s466 = scalar_lea.vmem %s0, %s465
        %p467 = pneg %p64
        %p468 = pneg %p61
        %s469 = sadd.s32 %s28, 1
        %s470 = smul.u32 %s469, 8
        %p471 = scmp.lt.s32.totalorder %s470, 8
        %s472 = scalar_select %p471, %s470, 8
        %p473 = scmp.lt.s32.totalorder %s27, 1
        %s474 = scalar_select %p473, %s27, 1
        %p475 = scmp.lt.s32.totalorder %s472, 8
        %s476 = scalar_select %p475, %s472, 8
        %s477 = smul.addr %s476, 2
        %s478 = smul.addr %s474, 18
        %s479 = sadd.s32 %s477, %s478
        %s480 = smul.addr %s479, 8
        %s481 = scalar_lea.vmem %s1, %s480
        %p482 = pneg %p100
        %p483 = pneg %p97
        %s484 = smul.u32 8, %s28
        %s485 = ssub.s32 9, %s484
        %p486 = scmp.lt.s32.totalorder %s485, 8
        %s487 = scalar_select %p486, %s485, 8
        %s488 = smul.u32 8, %s487
        %p489 = scmp.lt.s32.totalorder %s27, 1
        %s490 = scalar_select %p489, %s27, 1
        %p491 = scmp.lt.s32.totalorder %s484, 8
        %s492 = scalar_select %p491, %s484, 8
        %s493 = smul.addr %s490, 9
        %s494 = sadd.s32 %s492, %s493
        %s495 = smul.addr %s494, 8
        %s496 = scalar_lea.vmem %s2, %s495
        %p497 = pneg %p128
        %p498 = pneg %p125
        %s499 = sadd.s32 %s28, 1
        %s500 = smul.u32 %s499, 8
        %p501 = scmp.lt.s32.totalorder %s500, 8
        %s502 = scalar_select %p501, %s500, 8
        %p503 = scmp.lt.s32.totalorder %s27, 1
        %s504 = scalar_select %p503, %s27, 1
        %p505 = scmp.lt.s32.totalorder %s502, 8
        %s506 = scalar_select %p505, %s502, 8
        %s507 = smul.addr %s504, 9
        %s508 = sadd.s32 %s506, %s507
        %s509 = smul.addr %s508, 8
        %s510 = scalar_lea.vmem %s3, %s509
        %p511 = pneg %p164
        %p512 = pneg %p161
        %s513 = smul.u32 8, %s28
        %p514 = scmp.lt.s32.totalorder %s27, 1
        %s515 = scalar_select %p514, %s27, 1
        %p516 = scmp.lt.s32.totalorder %s513, 7
        %s517 = scalar_select %p516, %s513, 7
        %s518 = smul.addr %s517, 2
        %s519 = smul.addr %s515, 16
        %s520 = sadd.s32 %s518, %s519
        %s521 = smul.addr %s520, 8
        %s522 = scalar_lea.vmem %s4, %s521
        %p523 = pneg %p192
        %p524 = pneg %p189
        %s525 = smul.u32 8, %s28
        %p526 = scmp.lt.s32.totalorder %s27, 1
        %s527 = scalar_select %p526, %s27, 1
        %p528 = scmp.lt.s32.totalorder %s525, 7
        %s529 = scalar_select %p528, %s525, 7
        %s530 = smul.addr %s527, 8
        %s531 = sadd.s32 %s529, %s530
        %s532 = smul.addr %s531, 8
        %s533 = scalar_lea.vmem %s5, %s532
        %p534 = pneg %p220
        %p535 = pneg %p217
        %p536 = scmp.lt.s32.totalorder %s29, 0
        %s537 = scalar_select %p536, %s29, 0
        %s538 = smul.addr %s537, 4
        %s539 = scalar_lea.vmem %s6, %s538
        %p540 = pneg %p246
        %p541 = pneg %p243
        %p542 = scmp.lt.s32.totalorder %s29, 0
        %s543 = scalar_select %p542, %s29, 0
        %s544 = scalar_lea.vmem %s7, %s543
        %p545 = pneg %p272
        %p546 = pneg %p269
        %p547 = pneg %p302
        %p548 = pneg %p299
        %s549 = sand.u32 %s289, 1
        %s550 = scalar_lea.sflag [#allocation3], %s549
        %s551 = sand.u32 %s289, 1
        %s552 = smul.addr %s551, 64
        %s553 = scalar_lea.vmem [#allocation2], %s552
        %s554 = smul.u32 8, %s28
        %s555 = ssub.s32 9, %s554
        %p556 = scmp.lt.s32.totalorder %s555, 8
        %s557 = scalar_select %p556, %s555, 8
        %s558 = smul.u32 8, %s557
        %s559 = smul.u32 %s558, 2
        %p560 = scmp.lt.s32.totalorder %s27, 1
        %s561 = scalar_select %p560, %s27, 1
        %p562 = scmp.lt.s32.totalorder %s554, 8
        %s563 = scalar_select %p562, %s554, 8
        %s564 = smul.addr %s563, 2
        %s565 = smul.addr %s561, 18
        %s566 = sadd.s32 %s564, %s565
        %s567 = smul.addr %s566, 8
        %s568 = scalar_lea.vmem %s0, %s567
        %s569 = smul.u32 8, %s28
        %s570 = ssub.s32 9, %s569
        %p571 = scmp.lt.s32.totalorder %s570, 8
        %s572 = scalar_select %p571, %s570, 8
        %s573 = smul.u32 8, %s572
        %s574 = smul.u32 %s573, 2
        %s575 = sadd.s32 %s28, 1
        %s576 = smul.u32 %s575, 8
        %p577 = scmp.lt.s32.totalorder %s576, 8
        %s578 = scalar_select %p577, %s576, 8
        %p579 = scmp.lt.s32.totalorder %s27, 1
        %s580 = scalar_select %p579, %s27, 1
        %p581 = scmp.lt.s32.totalorder %s578, 8
        %s582 = scalar_select %p581, %s578, 8
        %s583 = smul.addr %s582, 2
        %s584 = smul.addr %s580, 18
        %s585 = sadd.s32 %s583, %s584
        %s586 = smul.addr %s585, 8
        %s587 = scalar_lea.vmem %s1, %s586
        %s588 = sadd.s32 %s28, 1
        %s589 = smul.u32 %s588, 8
        %p590 = scmp.lt.s32.totalorder %s589, 8
        %s591 = scalar_select %p590, %s589, 8
        %s592 = smul.u32 8, %s28
        %s593 = ssub.s32 9, %s592
        %p594 = scmp.lt.s32.totalorder %s593, 8
        %s595 = scalar_select %p594, %s593, 8
        %s596 = smul.u32 8, %s595
        %p597 = scmp.lt.s32.totalorder %s27, 1
        %s598 = scalar_select %p597, %s27, 1
        %p599 = scmp.lt.s32.totalorder %s592, 8
        %s600 = scalar_select %p599, %s592, 8
        %s601 = smul.addr %s598, 9
        %s602 = sadd.s32 %s600, %s601
        %s603 = smul.addr %s602, 8
        %s604 = scalar_lea.vmem %s2, %s603
        %s605 = smul.u32 8, %s28
        %s606 = ssub.s32 9, %s605
        %p607 = scmp.lt.s32.totalorder %s606, 8
        %s608 = scalar_select %p607, %s606, 8
        %s609 = smul.u32 8, %s608
        %s610 = sadd.s32 %s28, 1
        %s611 = smul.u32 %s610, 8
        %p612 = scmp.lt.s32.totalorder %s611, 8
        %s613 = scalar_select %p612, %s611, 8
        %p614 = scmp.lt.s32.totalorder %s27, 1
        %s615 = scalar_select %p614, %s27, 1
        %p616 = scmp.lt.s32.totalorder %s613, 8
        %s617 = scalar_select %p616, %s613, 8
        %s618 = smul.addr %s615, 9
        %s619 = sadd.s32 %s617, %s618
        %s620 = smul.addr %s619, 8
        %s621 = scalar_lea.vmem %s3, %s620
        %s622 = sadd.s32 %s28, 1
        %s623 = smul.u32 %s622, 8
        %p624 = scmp.lt.s32.totalorder %s623, 8
        %s625 = scalar_select %p624, %s623, 8
        %s626 = smul.u32 8, %s28
        %p627 = scmp.lt.s32.totalorder %s27, 1
        %s628 = scalar_select %p627, %s27, 1
        %p629 = scmp.lt.s32.totalorder %s626, 7
        %s630 = scalar_select %p629, %s626, 7
        %s631 = smul.addr %s630, 2
        %s632 = smul.addr %s628, 16
        %s633 = sadd.s32 %s631, %s632
        %s634 = smul.addr %s633, 8
        %s635 = scalar_lea.vmem %s4, %s634
        %s636 = smul.u32 8, %s28
        %s637 = smul.u32 8, %s28
        %p638 = scmp.lt.s32.totalorder %s27, 1
        %s639 = scalar_select %p638, %s27, 1
        %p640 = scmp.lt.s32.totalorder %s637, 7
        %s641 = scalar_select %p640, %s637, 7
        %s642 = smul.addr %s639, 8
        %s643 = sadd.s32 %s641, %s642
        %s644 = smul.addr %s643, 8
        %s645 = scalar_lea.vmem %s5, %s644
        %s646 = smul.u32 8, %s28
        %p647 = scmp.lt.s32.totalorder %s29, 0
        %s648 = scalar_select %p647, %s29, 0
        %s649 = smul.addr %s648, 4
        %s650 = scalar_lea.vmem %s6, %s649
        %p651 = scmp.lt.s32.totalorder %s29, 0
        %s652 = scalar_select %p651, %s29, 0
        %s653 = scalar_lea.vmem %s7, %s652
        %s654 = smul.u32 8, %s28
        %v655 = vld [vmem:[%s568] sm:$0xff]
        %v656 = vld [vmem:[%s568 + $0x8] sm:$0x1]
        %v657 = vld [vmem:[%s568 + $0x10] sm:$0xff]
        %v658 = vld [vmem:[%s568 + $0x18] sm:$0x1]
        %v659 = vld [vmem:[%s568 + $0x20] sm:$0xff]
        %v660 = vld [vmem:[%s568 + $0x28] sm:$0x1]
        %v661 = vld [vmem:[%s568 + $0x30] sm:$0xff]
        %v662 = vld [vmem:[%s568 + $0x38] sm:$0x1]
        %v663 = vld [vmem:[%s568 + $0x40] sm:$0xff]
        %v664 = vld [vmem:[%s568 + $0x48] sm:$0x1]
        %v665 = vld [vmem:[%s568 + $0x50] sm:$0xff]
        %v666 = vld [vmem:[%s568 + $0x58] sm:$0x1]
        %v667 = vld [vmem:[%s568 + $0x60] sm:$0xff]
        %v668 = vld [vmem:[%s568 + $0x68] sm:$0x1]
        %v669 = vld [vmem:[%s568 + $0x70] sm:$0xff]
        %v670 = vld [vmem:[%s568 + $0x78] sm:$0x1]
        %v671 = vld [vmem:[%s587] sm:$0xff]
        %v672 = vld [vmem:[%s587 + $0x8] sm:$0x1]
        %v673 = vld [vmem:[%s604] sm:$0xff]
        %v674 = vld [vmem:[%s604 + $0x8] sm:$0xff]
        %v675 = vld [vmem:[%s604 + $0x10] sm:$0xff]
        %v676 = vld [vmem:[%s604 + $0x18] sm:$0xff]
        %v677 = vld [vmem:[%s604 + $0x20] sm:$0xff]
        %v678 = vld [vmem:[%s604 + $0x28] sm:$0xff]
        %v679 = vld [vmem:[%s604 + $0x30] sm:$0xff]
        %v680 = vld [vmem:[%s604 + $0x38] sm:$0xff]
        %v681 = vld [vmem:[%s621] sm:$0xff]
        %v682 = vld [vmem:[%s635] sm:$0xff]
        %v683 = vld [vmem:[%s635 + $0x8] sm:$0x1]
        %v684 = vld [vmem:[%s635 + $0x10] sm:$0xff]
        %v685 = vld [vmem:[%s635 + $0x18] sm:$0x1]
        %v686 = vld [vmem:[%s635 + $0x20] sm:$0xff]
        %v687 = vld [vmem:[%s635 + $0x28] sm:$0x1]
        %v688 = vld [vmem:[%s635 + $0x30] sm:$0xff]
        %v689 = vld [vmem:[%s635 + $0x38] sm:$0x1]
        %v690 = vld [vmem:[%s635 + $0x40] sm:$0xff]
        %v691 = vld [vmem:[%s635 + $0x48] sm:$0x1]
        %v692 = vld [vmem:[%s635 + $0x50] sm:$0xff]
        %v693 = vld [vmem:[%s635 + $0x58] sm:$0x1]
        %v694 = vld [vmem:[%s635 + $0x60] sm:$0xff]
        %v695 = vld [vmem:[%s635 + $0x68] sm:$0x1]
        %v696 = vld [vmem:[%s635 + $0x70] sm:$0xff]
        %v697 = vld [vmem:[%s635 + $0x78] sm:$0x1]
        %v698 = vld [vmem:[%s645] sm:$0xff]
        %v699 = vld [vmem:[%s645 + $0x8] sm:$0xff]
        %v700 = vld [vmem:[%s645 + $0x10] sm:$0xff]
        %v701 = vld [vmem:[%s645 + $0x18] sm:$0xff]
        %v702 = vld [vmem:[%s645 + $0x20] sm:$0xff]
        %v703 = vld [vmem:[%s645 + $0x28] sm:$0xff]
        %v704 = vld [vmem:[%s645 + $0x30] sm:$0xff]
        %v705 = vld [vmem:[%s645 + $0x38] sm:$0xff]
        %v706 = vld [vmem:[%s653] sm:$0x1]
        %v708 = vperm.slane %v706, 0
        %v710 = vld [vmem:[%s650] sm:$0xf]
        %vm711 = vcmask 31744
        %v713 = vsel %vm711, %v655, 0
        %v716 = vsel %vm711, %v657, 0
        %v719 = vsel %vm711, %v659, 0
        %v722 = vsel %vm711, %v661, 0
        %v725 = vsel %vm711, %v663, 0
        %v728 = vsel %vm711, %v665, 0
        %v731 = vsel %vm711, %v667, 0
        %v734 = vsel %vm711, %v669, 0
        %vm736 = vcmask 1043456
        %v738 = vsel %vm736, %v710, 0
        %740 = vmatpush.msra.mxu0 0.0
        %741 = vmatpush.msra.mxu0 0.0
        %742 = vmatpush.msra.mxu0 0.0
        %743 = vmatpush.msra.mxu0 0.0
        %744 = vmatpush.msra.mxu0 0.0
        %745 = vmatpush.msra.mxu0 0.0
        %746 = vmatpush.msra.mxu0 0.0
        %747 = vmatpush.msra.mxu0 0.0
        %748 = vmatpush.msra.mxu0 0.0
        %749 = vmatpush.msra.mxu0 0.0
        %750 = vmatpush.msra.mxu0 0.0
        %751 = vmatpush.msra.mxu0 0.0
        %752 = vmatpush.msra.mxu0 0.0
        %753 = vmatpush.msra.mxu0 0.0
        %754 = vmatpush.msra.mxu0 0.0
        %755 = vmatpush.msra.mxu0 %v738
        %756 = vmatmul.f32.gmra.mxu0 %v713
        %v757 = vpop.f32.mrf.mxu0
        %v758 = vadd.f32 0.0, %v757
        %759 = vmatmul.f32.gmra.mxu0 %v716
        %v760 = vpop.f32.mrf.mxu0
        %v761 = vadd.f32 0.0, %v760
        %762 = vmatmul.f32.gmra.mxu0 %v719
        %v763 = vpop.f32.mrf.mxu0
        %v764 = vadd.f32 0.0, %v763
        %765 = vmatmul.f32.gmra.mxu0 %v722
        %v766 = vpop.f32.mrf.mxu0
        %v767 = vadd.f32 0.0, %v766
        %768 = vmatmul.f32.gmra.mxu0 %v725
        %v769 = vpop.f32.mrf.mxu0
        %v770 = vadd.f32 0.0, %v769
        %771 = vmatmul.f32.gmra.mxu0 %v728
        %v772 = vpop.f32.mrf.mxu0
        %v773 = vadd.f32 0.0, %v772
        %774 = vmatmul.f32.gmra.mxu0 %v731
        %v775 = vpop.f32.mrf.mxu0
        %v776 = vadd.f32 0.0, %v775
        %777 = vmatmul.f32.gmra.mxu0 %v734
        %v778 = vpop.f32.mrf.mxu0
        %v779 = vadd.f32 0.0, %v778
        %780 = vdwg.mxu0
        %v781 = vadd.f32 %v708, %v758
        %v782 = vadd.f32 %v708, %v761
        %v783 = vadd.f32 %v708, %v764
        %v784 = vadd.f32 %v708, %v767
        %v785 = vadd.f32 %v708, %v770
        %v786 = vadd.f32 %v708, %v773
        %v787 = vadd.f32 %v708, %v776
        %v788 = vadd.f32 %v708, %v779
        %s789 = scalar_lea.vmem %s650, 4
        %v790 = vld [vmem:[%s789] sm:$0xf]
        %v792 = vsel %vm711, %v673, 0
        %v795 = vsel %vm711, %v674, 0
        %v798 = vsel %vm711, %v675, 0
        %v801 = vsel %vm711, %v676, 0
        %v804 = vsel %vm711, %v677, 0
        %v807 = vsel %vm711, %v678, 0
        %v810 = vsel %vm711, %v679, 0
        %v813 = vsel %vm711, %v680, 0
        %v816 = vsel %vm736, %v790, 0
        %818 = vmatpush.msra.mxu0 0.0
        %819 = vmatpush.msra.mxu0 0.0
        %820 = vmatpush.msra.mxu0 0.0
        %821 = vmatpush.msra.mxu0 0.0
        %822 = vmatpush.msra.mxu0 0.0
        %823 = vmatpush.msra.mxu0 0.0
        %824 = vmatpush.msra.mxu0 0.0
        %825 = vmatpush.msra.mxu0 0.0
        %826 = vmatpush.msra.mxu0 0.0
        %827 = vmatpush.msra.mxu0 0.0
        %828 = vmatpush.msra.mxu0 0.0
        %829 = vmatpush.msra.mxu0 0.0
        %830 = vmatpush.msra.mxu0 0.0
        %831 = vmatpush.msra.mxu0 0.0
        %832 = vmatpush.msra.mxu0 0.0
        %833 = vmatpush.msra.mxu0 %v816
        %834 = vmatmul.f32.gmra.mxu0 %v792
        %v835 = vpop.f32.mrf.mxu0
        %v836 = vadd.f32 0.0, %v835
        %837 = vmatmul.f32.gmra.mxu0 %v795
        %v838 = vpop.f32.mrf.mxu0
        %v839 = vadd.f32 0.0, %v838
        %840 = vmatmul.f32.gmra.mxu0 %v798
        %v841 = vpop.f32.mrf.mxu0
        %v842 = vadd.f32 0.0, %v841
        %843 = vmatmul.f32.gmra.mxu0 %v801
        %v844 = vpop.f32.mrf.mxu0
        %v845 = vadd.f32 0.0, %v844
        %846 = vmatmul.f32.gmra.mxu0 %v804
        %v847 = vpop.f32.mrf.mxu0
        %v848 = vadd.f32 0.0, %v847
        %849 = vmatmul.f32.gmra.mxu0 %v807
        %v850 = vpop.f32.mrf.mxu0
        %v851 = vadd.f32 0.0, %v850
        %852 = vmatmul.f32.gmra.mxu0 %v810
        %v853 = vpop.f32.mrf.mxu0
        %v854 = vadd.f32 0.0, %v853
        %855 = vmatmul.f32.gmra.mxu0 %v813
        %v856 = vpop.f32.mrf.mxu0
        %v857 = vadd.f32 0.0, %v856
        %858 = vdwg.mxu0
        %v859 = vadd.f32 %v781, %v836
        %v860 = vadd.f32 %v782, %v839
        %v861 = vadd.f32 %v783, %v842
        %v862 = vadd.f32 %v784, %v845
        %v863 = vadd.f32 %v785, %v848
        %v864 = vadd.f32 %v786, %v851
        %v865 = vadd.f32 %v787, %v854
        %v866 = vadd.f32 %v788, %v857
        %vm875 = vcmask 1046528
        %v876 = vrot.slane %v655, 1
        %v877 = vrot.slane %v656, 1
        %v878 = vsel %vm875, %v876, %v877
        %v879 = vrot.slane %v657, 1
        %v880 = vrot.slane %v658, 1
        %v881 = vsel %vm875, %v879, %v880
        %v882 = vrot.slane %v659, 1
        %v883 = vrot.slane %v660, 1
        %v884 = vsel %vm875, %v882, %v883
        %v885 = vrot.slane %v661, 1
        %v886 = vrot.slane %v662, 1
        %v887 = vsel %vm875, %v885, %v886
        %v888 = vrot.slane %v663, 1
        %v889 = vrot.slane %v664, 1
        %v890 = vsel %vm875, %v888, %v889
        %v891 = vrot.slane %v665, 1
        %v892 = vrot.slane %v666, 1
        %v893 = vsel %vm875, %v891, %v892
        %v894 = vrot.slane %v667, 1
        %v895 = vrot.slane %v668, 1
        %v896 = vsel %vm875, %v894, %v895
        %v897 = vrot.slane %v669, 1
        %v898 = vrot.slane %v670, 1
        %v899 = vsel %vm875, %v897, %v898
        %s900 = scalar_lea.vmem %s650, 8
        %v901 = vld [vmem:[%s900] sm:$0xf]
        %v902 = vsel %vm711, %v878, 0
        %v904 = vsel %vm711, %v881, 0
        %v906 = vsel %vm711, %v884, 0
        %v908 = vsel %vm711, %v887, 0
        %v910 = vsel %vm711, %v890, 0
        %v912 = vsel %vm711, %v893, 0
        %v914 = vsel %vm711, %v896, 0
        %v916 = vsel %vm711, %v899, 0
        %v919 = vsel %vm736, %v901, 0
        %921 = vmatpush.msra.mxu0 0.0
        %922 = vmatpush.msra.mxu0 0.0
        %923 = vmatpush.msra.mxu0 0.0
        %924 = vmatpush.msra.mxu0 0.0
        %925 = vmatpush.msra.mxu0 0.0
        %926 = vmatpush.msra.mxu0 0.0
        %927 = vmatpush.msra.mxu0 0.0
        %928 = vmatpush.msra.mxu0 0.0
        %929 = vmatpush.msra.mxu0 0.0
        %930 = vmatpush.msra.mxu0 0.0
        %931 = vmatpush.msra.mxu0 0.0
        %932 = vmatpush.msra.mxu0 0.0
        %933 = vmatpush.msra.mxu0 0.0
        %934 = vmatpush.msra.mxu0 0.0
        %935 = vmatpush.msra.mxu0 0.0
        %936 = vmatpush.msra.mxu0 %v919
        %937 = vmatmul.f32.gmra.mxu0 %v902
        %v938 = vpop.f32.mrf.mxu0
        %v939 = vadd.f32 0.0, %v938
        %940 = vmatmul.f32.gmra.mxu0 %v904
        %v941 = vpop.f32.mrf.mxu0
        %v942 = vadd.f32 0.0, %v941
        %943 = vmatmul.f32.gmra.mxu0 %v906
        %v944 = vpop.f32.mrf.mxu0
        %v945 = vadd.f32 0.0, %v944
        %946 = vmatmul.f32.gmra.mxu0 %v908
        %v947 = vpop.f32.mrf.mxu0
        %v948 = vadd.f32 0.0, %v947
        %949 = vmatmul.f32.gmra.mxu0 %v910
        %v950 = vpop.f32.mrf.mxu0
        %v951 = vadd.f32 0.0, %v950
        %952 = vmatmul.f32.gmra.mxu0 %v912
        %v953 = vpop.f32.mrf.mxu0
        %v954 = vadd.f32 0.0, %v953
        %955 = vmatmul.f32.gmra.mxu0 %v914
        %v956 = vpop.f32.mrf.mxu0
        %v957 = vadd.f32 0.0, %v956
        %958 = vmatmul.f32.gmra.mxu0 %v916
        %v959 = vpop.f32.mrf.mxu0
        %v960 = vadd.f32 0.0, %v959
        %961 = vdwg.mxu0
        %v962 = vadd.f32 %v859, %v939
        %v963 = vadd.f32 %v860, %v942
        %v964 = vadd.f32 %v861, %v945
        %v965 = vadd.f32 %v862, %v948
        %v966 = vadd.f32 %v863, %v951
        %v967 = vadd.f32 %v864, %v954
        %v968 = vadd.f32 %v865, %v957
        %v969 = vadd.f32 %v866, %v960
        %s970 = scalar_lea.vmem %s650, 12
        %v971 = vld [vmem:[%s970] sm:$0xf]
        %v973 = vsel %vm711, %v682, 0
        %v976 = vsel %vm711, %v684, 0
        %v979 = vsel %vm711, %v686, 0
        %v982 = vsel %vm711, %v688, 0
        %v985 = vsel %vm711, %v690, 0
        %v988 = vsel %vm711, %v692, 0
        %v991 = vsel %vm711, %v694, 0
        %v994 = vsel %vm711, %v696, 0
        %v997 = vsel %vm736, %v971, 0
        %999 = vmatpush.msra.mxu0 0.0
        %1000 = vmatpush.msra.mxu0 0.0
        %1001 = vmatpush.msra.mxu0 0.0
        %1002 = vmatpush.msra.mxu0 0.0
        %1003 = vmatpush.msra.mxu0 0.0
        %1004 = vmatpush.msra.mxu0 0.0
        %1005 = vmatpush.msra.mxu0 0.0
        %1006 = vmatpush.msra.mxu0 0.0
        %1007 = vmatpush.msra.mxu0 0.0
        %1008 = vmatpush.msra.mxu0 0.0
        %1009 = vmatpush.msra.mxu0 0.0
        %1010 = vmatpush.msra.mxu0 0.0
        %1011 = vmatpush.msra.mxu0 0.0
        %1012 = vmatpush.msra.mxu0 0.0
        %1013 = vmatpush.msra.mxu0 0.0
        %1014 = vmatpush.msra.mxu0 %v997
        %1015 = vmatmul.f32.gmra.mxu0 %v973
        %v1016 = vpop.f32.mrf.mxu0
        %v1017 = vadd.f32 0.0, %v1016
        %1018 = vmatmul.f32.gmra.mxu0 %v976
        %v1019 = vpop.f32.mrf.mxu0
        %v1020 = vadd.f32 0.0, %v1019
        %1021 = vmatmul.f32.gmra.mxu0 %v979
        %v1022 = vpop.f32.mrf.mxu0
        %v1023 = vadd.f32 0.0, %v1022
        %1024 = vmatmul.f32.gmra.mxu0 %v982
        %v1025 = vpop.f32.mrf.mxu0
        %v1026 = vadd.f32 0.0, %v1025
        %1027 = vmatmul.f32.gmra.mxu0 %v985
        %v1028 = vpop.f32.mrf.mxu0
        %v1029 = vadd.f32 0.0, %v1028
        %1030 = vmatmul.f32.gmra.mxu0 %v988
        %v1031 = vpop.f32.mrf.mxu0
        %v1032 = vadd.f32 0.0, %v1031
        %1033 = vmatmul.f32.gmra.mxu0 %v991
        %v1034 = vpop.f32.mrf.mxu0
        %v1035 = vadd.f32 0.0, %v1034
        %1036 = vmatmul.f32.gmra.mxu0 %v994
        %v1037 = vpop.f32.mrf.mxu0
        %v1038 = vadd.f32 0.0, %v1037
        %1039 = vdwg.mxu0
        %v1040 = vadd.f32 %v962, %v1017
        %v1041 = vadd.f32 %v963, %v1020
        %v1042 = vadd.f32 %v964, %v1023
        %v1043 = vadd.f32 %v965, %v1026
        %v1044 = vadd.f32 %v966, %v1029
        %v1045 = vadd.f32 %v967, %v1032
        %v1046 = vadd.f32 %v968, %v1035
        %v1047 = vadd.f32 %v969, %v1038
        %s1048 = scalar_lea.vmem %s650, 16
        %v1049 = vld [vmem:[%s1048] sm:$0xf]
        %v1051 = vsel %vm711, %v698, 0
        %v1054 = vsel %vm711, %v699, 0
        %v1057 = vsel %vm711, %v700, 0
        %v1060 = vsel %vm711, %v701, 0
        %v1063 = vsel %vm711, %v702, 0
        %v1066 = vsel %vm711, %v703, 0
        %v1069 = vsel %vm711, %v704, 0
        %v1072 = vsel %vm711, %v705, 0
        %v1075 = vsel %vm736, %v1049, 0
        %1077 = vmatpush.msra.mxu0 0.0
        %1078 = vmatpush.msra.mxu0 0.0
        %1079 = vmatpush.msra.mxu0 0.0
        %1080 = vmatpush.msra.mxu0 0.0
        %1081 = vmatpush.msra.mxu0 0.0
        %1082 = vmatpush.msra.mxu0 0.0
        %1083 = vmatpush.msra.mxu0 0.0
        %1084 = vmatpush.msra.mxu0 0.0
        %1085 = vmatpush.msra.mxu0 0.0
        %1086 = vmatpush.msra.mxu0 0.0
        %1087 = vmatpush.msra.mxu0 0.0
        %1088 = vmatpush.msra.mxu0 0.0
        %1089 = vmatpush.msra.mxu0 0.0
        %1090 = vmatpush.msra.mxu0 0.0
        %1091 = vmatpush.msra.mxu0 0.0
        %1092 = vmatpush.msra.mxu0 %v1075
        %1093 = vmatmul.f32.gmra.mxu0 %v1051
        %v1094 = vpop.f32.mrf.mxu0
        %v1095 = vadd.f32 0.0, %v1094
        %1096 = vmatmul.f32.gmra.mxu0 %v1054
        %v1097 = vpop.f32.mrf.mxu0
        %v1098 = vadd.f32 0.0, %v1097
        %1099 = vmatmul.f32.gmra.mxu0 %v1057
        %v1100 = vpop.f32.mrf.mxu0
        %v1101 = vadd.f32 0.0, %v1100
        %1102 = vmatmul.f32.gmra.mxu0 %v1060
        %v1103 = vpop.f32.mrf.mxu0
        %v1104 = vadd.f32 0.0, %v1103
        %1105 = vmatmul.f32.gmra.mxu0 %v1063
        %v1106 = vpop.f32.mrf.mxu0
        %v1107 = vadd.f32 0.0, %v1106
        %1108 = vmatmul.f32.gmra.mxu0 %v1066
        %v1109 = vpop.f32.mrf.mxu0
        %v1110 = vadd.f32 0.0, %v1109
        %1111 = vmatmul.f32.gmra.mxu0 %v1069
        %v1112 = vpop.f32.mrf.mxu0
        %v1113 = vadd.f32 0.0, %v1112
        %1114 = vmatmul.f32.gmra.mxu0 %v1072
        %v1115 = vpop.f32.mrf.mxu0
        %v1116 = vadd.f32 0.0, %v1115
        %1117 = vdwg.mxu0
        %v1118 = vadd.f32 %v1040, %v1095
        %v1119 = vadd.f32 %v1041, %v1098
        %v1120 = vadd.f32 %v1042, %v1101
        %v1121 = vadd.f32 %v1043, %v1104
        %v1122 = vadd.f32 %v1044, %v1107
        %v1123 = vadd.f32 %v1045, %v1110
        %v1124 = vadd.f32 %v1046, %v1113
        %v1125 = vadd.f32 %v1047, %v1116
        %v1134 = vrot.slane %v682, 1
        %v1135 = vrot.slane %v683, 1
        %v1136 = vsel %vm875, %v1134, %v1135
        %v1137 = vrot.slane %v684, 1
        %v1138 = vrot.slane %v685, 1
        %v1139 = vsel %vm875, %v1137, %v1138
        %v1140 = vrot.slane %v686, 1
        %v1141 = vrot.slane %v687, 1
        %v1142 = vsel %vm875, %v1140, %v1141
        %v1143 = vrot.slane %v688, 1
        %v1144 = vrot.slane %v689, 1
        %v1145 = vsel %vm875, %v1143, %v1144
        %v1146 = vrot.slane %v690, 1
        %v1147 = vrot.slane %v691, 1
        %v1148 = vsel %vm875, %v1146, %v1147
        %v1149 = vrot.slane %v692, 1
        %v1150 = vrot.slane %v693, 1
        %v1151 = vsel %vm875, %v1149, %v1150
        %v1152 = vrot.slane %v694, 1
        %v1153 = vrot.slane %v695, 1
        %v1154 = vsel %vm875, %v1152, %v1153
        %v1155 = vrot.slane %v696, 1
        %v1156 = vrot.slane %v697, 1
        %v1157 = vsel %vm875, %v1155, %v1156
        %s1158 = scalar_lea.vmem %s650, 20
        %v1159 = vld [vmem:[%s1158] sm:$0xf]
        %v1160 = vsel %vm711, %v1136, 0
        %v1162 = vsel %vm711, %v1139, 0
        %v1164 = vsel %vm711, %v1142, 0
        %v1166 = vsel %vm711, %v1145, 0
        %v1168 = vsel %vm711, %v1148, 0
        %v1170 = vsel %vm711, %v1151, 0
        %v1172 = vsel %vm711, %v1154, 0
        %v1174 = vsel %vm711, %v1157, 0
        %v1177 = vsel %vm736, %v1159, 0
        %1179 = vmatpush.msra.mxu0 0.0
        %1180 = vmatpush.msra.mxu0 0.0
        %1181 = vmatpush.msra.mxu0 0.0
        %1182 = vmatpush.msra.mxu0 0.0
        %1183 = vmatpush.msra.mxu0 0.0
        %1184 = vmatpush.msra.mxu0 0.0
        %1185 = vmatpush.msra.mxu0 0.0
        %1186 = vmatpush.msra.mxu0 0.0
        %1187 = vmatpush.msra.mxu0 0.0
        %1188 = vmatpush.msra.mxu0 0.0
        %1189 = vmatpush.msra.mxu0 0.0
        %1190 = vmatpush.msra.mxu0 0.0
        %1191 = vmatpush.msra.mxu0 0.0
        %1192 = vmatpush.msra.mxu0 0.0
        %1193 = vmatpush.msra.mxu0 0.0
        %1194 = vmatpush.msra.mxu0 %v1177
        %1195 = vmatmul.f32.gmra.mxu0 %v1160
        %v1196 = vpop.f32.mrf.mxu0
        %v1197 = vadd.f32 0.0, %v1196
        %1198 = vmatmul.f32.gmra.mxu0 %v1162
        %v1199 = vpop.f32.mrf.mxu0
        %v1200 = vadd.f32 0.0, %v1199
        %1201 = vmatmul.f32.gmra.mxu0 %v1164
        %v1202 = vpop.f32.mrf.mxu0
        %v1203 = vadd.f32 0.0, %v1202
        %1204 = vmatmul.f32.gmra.mxu0 %v1166
        %v1205 = vpop.f32.mrf.mxu0
        %v1206 = vadd.f32 0.0, %v1205
        %1207 = vmatmul.f32.gmra.mxu0 %v1168
        %v1208 = vpop.f32.mrf.mxu0
        %v1209 = vadd.f32 0.0, %v1208
        %1210 = vmatmul.f32.gmra.mxu0 %v1170
        %v1211 = vpop.f32.mrf.mxu0
        %v1212 = vadd.f32 0.0, %v1211
        %1213 = vmatmul.f32.gmra.mxu0 %v1172
        %v1214 = vpop.f32.mrf.mxu0
        %v1215 = vadd.f32 0.0, %v1214
        %1216 = vmatmul.f32.gmra.mxu0 %v1174
        %v1217 = vpop.f32.mrf.mxu0
        %v1218 = vadd.f32 0.0, %v1217
        %1219 = vdwg.mxu0
        %v1220 = vadd.f32 %v1118, %v1197
        %v1221 = vadd.f32 %v1119, %v1200
        %v1222 = vadd.f32 %v1120, %v1203
        %v1223 = vadd.f32 %v1121, %v1206
        %v1224 = vadd.f32 %v1122, %v1209
        %v1225 = vadd.f32 %v1123, %v1212
        %v1226 = vadd.f32 %v1124, %v1215
        %v1227 = vadd.f32 %v1125, %v1218
        %s1228 = scalar_lea.vmem %s650, 24
        %v1229 = vld [vmem:[%s1228] sm:$0xf]
        %v1231 = vsel %vm711, %v671, 0
        %v1234 = vsel %vm736, %v1229, 0
        %1236 = vmatpush.msra.mxu0 0.0
        %1237 = vmatpush.msra.mxu0 0.0
        %1238 = vmatpush.msra.mxu0 0.0
        %1239 = vmatpush.msra.mxu0 0.0
        %1240 = vmatpush.msra.mxu0 0.0
        %1241 = vmatpush.msra.mxu0 0.0
        %1242 = vmatpush.msra.mxu0 0.0
        %1243 = vmatpush.msra.mxu0 0.0
        %1244 = vmatpush.msra.mxu0 0.0
        %1245 = vmatpush.msra.mxu0 0.0
        %1246 = vmatpush.msra.mxu0 0.0
        %1247 = vmatpush.msra.mxu0 0.0
        %1248 = vmatpush.msra.mxu0 0.0
        %1249 = vmatpush.msra.mxu0 0.0
        %1250 = vmatpush.msra.mxu0 0.0
        %1251 = vmatpush.msra.mxu0 %v1234
        %1252 = vmatmul.f32.gmra.mxu0 %v716
        %v1253 = vpop.f32.mrf.mxu0
        %v1254 = vadd.f32 0.0, %v1253
        %1255 = vmatmul.f32.gmra.mxu0 %v719
        %v1256 = vpop.f32.mrf.mxu0
        %v1257 = vadd.f32 0.0, %v1256
        %1258 = vmatmul.f32.gmra.mxu0 %v722
        %v1259 = vpop.f32.mrf.mxu0
        %v1260 = vadd.f32 0.0, %v1259
        %1261 = vmatmul.f32.gmra.mxu0 %v725
        %v1262 = vpop.f32.mrf.mxu0
        %v1263 = vadd.f32 0.0, %v1262
        %1264 = vmatmul.f32.gmra.mxu0 %v728
        %v1265 = vpop.f32.mrf.mxu0
        %v1266 = vadd.f32 0.0, %v1265
        %1267 = vmatmul.f32.gmra.mxu0 %v731
        %v1268 = vpop.f32.mrf.mxu0
        %v1269 = vadd.f32 0.0, %v1268
        %1270 = vmatmul.f32.gmra.mxu0 %v734
        %v1271 = vpop.f32.mrf.mxu0
        %v1272 = vadd.f32 0.0, %v1271
        %1273 = vmatmul.f32.gmra.mxu0 %v1231
        %v1274 = vpop.f32.mrf.mxu0
        %v1275 = vadd.f32 0.0, %v1274
        %1276 = vdwg.mxu0
        %v1277 = vadd.f32 %v1220, %v1254
        %v1278 = vadd.f32 %v1221, %v1257
        %v1279 = vadd.f32 %v1222, %v1260
        %v1280 = vadd.f32 %v1223, %v1263
        %v1281 = vadd.f32 %v1224, %v1266
        %v1282 = vadd.f32 %v1225, %v1269
        %v1283 = vadd.f32 %v1226, %v1272
        %v1284 = vadd.f32 %v1227, %v1275
        %s1285 = scalar_lea.vmem %s650, 28
        %v1286 = vld [vmem:[%s1285] sm:$0xf]
        %v1288 = vsel %vm711, %v681, 0
        %v1291 = vsel %vm736, %v1286, 0
        %1293 = vmatpush.msra.mxu0 0.0
        %1294 = vmatpush.msra.mxu0 0.0
        %1295 = vmatpush.msra.mxu0 0.0
        %1296 = vmatpush.msra.mxu0 0.0
        %1297 = vmatpush.msra.mxu0 0.0
        %1298 = vmatpush.msra.mxu0 0.0
        %1299 = vmatpush.msra.mxu0 0.0
        %1300 = vmatpush.msra.mxu0 0.0
        %1301 = vmatpush.msra.mxu0 0.0
        %1302 = vmatpush.msra.mxu0 0.0
        %1303 = vmatpush.msra.mxu0 0.0
        %1304 = vmatpush.msra.mxu0 0.0
        %1305 = vmatpush.msra.mxu0 0.0
        %1306 = vmatpush.msra.mxu0 0.0
        %1307 = vmatpush.msra.mxu0 0.0
        %1308 = vmatpush.msra.mxu0 %v1291
        %1309 = vmatmul.f32.gmra.mxu0 %v795
        %v1310 = vpop.f32.mrf.mxu0
        %v1311 = vadd.f32 0.0, %v1310
        %1312 = vmatmul.f32.gmra.mxu0 %v798
        %v1313 = vpop.f32.mrf.mxu0
        %v1314 = vadd.f32 0.0, %v1313
        %1315 = vmatmul.f32.gmra.mxu0 %v801
        %v1316 = vpop.f32.mrf.mxu0
        %v1317 = vadd.f32 0.0, %v1316
        %1318 = vmatmul.f32.gmra.mxu0 %v804
        %v1319 = vpop.f32.mrf.mxu0
        %v1320 = vadd.f32 0.0, %v1319
        %1321 = vmatmul.f32.gmra.mxu0 %v807
        %v1322 = vpop.f32.mrf.mxu0
        %v1323 = vadd.f32 0.0, %v1322
        %1324 = vmatmul.f32.gmra.mxu0 %v810
        %v1325 = vpop.f32.mrf.mxu0
        %v1326 = vadd.f32 0.0, %v1325
        %1327 = vmatmul.f32.gmra.mxu0 %v813
        %v1328 = vpop.f32.mrf.mxu0
        %v1329 = vadd.f32 0.0, %v1328
        %1330 = vmatmul.f32.gmra.mxu0 %v1288
        %v1331 = vpop.f32.mrf.mxu0
        %v1332 = vadd.f32 0.0, %v1331
        %1333 = vdwg.mxu0
        %v1334 = vadd.f32 %v1277, %v1311
        %v1335 = vadd.f32 %v1278, %v1314
        %v1336 = vadd.f32 %v1279, %v1317
        %v1337 = vadd.f32 %v1280, %v1320
        %v1338 = vadd.f32 %v1281, %v1323
        %v1339 = vadd.f32 %v1282, %v1326
        %v1340 = vadd.f32 %v1283, %v1329
        %v1341 = vadd.f32 %v1284, %v1332
        %v1343 = vrot.slane %v671, 1
        %v1344 = vrot.slane %v672, 1
        %v1345 = vsel %vm875, %v1343, %v1344
        %s1346 = scalar_lea.vmem %s650, 32
        %v1347 = vld [vmem:[%s1346] sm:$0xf]
        %v1348 = vsel %vm711, %v1345, 0
        %v1351 = vsel %vm736, %v1347, 0
        %1353 = vmatpush.msra.mxu0 0.0
        %1354 = vmatpush.msra.mxu0 0.0
        %1355 = vmatpush.msra.mxu0 0.0
        %1356 = vmatpush.msra.mxu0 0.0
        %1357 = vmatpush.msra.mxu0 0.0
        %1358 = vmatpush.msra.mxu0 0.0
        %1359 = vmatpush.msra.mxu0 0.0
        %1360 = vmatpush.msra.mxu0 0.0
        %1361 = vmatpush.msra.mxu0 0.0
        %1362 = vmatpush.msra.mxu0 0.0
        %1363 = vmatpush.msra.mxu0 0.0
        %1364 = vmatpush.msra.mxu0 0.0
        %1365 = vmatpush.msra.mxu0 0.0
        %1366 = vmatpush.msra.mxu0 0.0
        %1367 = vmatpush.msra.mxu0 0.0
        %1368 = vmatpush.msra.mxu0 %v1351
        %1369 = vmatmul.f32.gmra.mxu0 %v904
        %v1370 = vpop.f32.mrf.mxu0
        %v1371 = vadd.f32 0.0, %v1370
        %1372 = vmatmul.f32.gmra.mxu0 %v906
        %v1373 = vpop.f32.mrf.mxu0
        %v1374 = vadd.f32 0.0, %v1373
        %1375 = vmatmul.f32.gmra.mxu0 %v908
        %v1376 = vpop.f32.mrf.mxu0
        %v1377 = vadd.f32 0.0, %v1376
        %1378 = vmatmul.f32.gmra.mxu0 %v910
        %v1379 = vpop.f32.mrf.mxu0
        %v1380 = vadd.f32 0.0, %v1379
        %1381 = vmatmul.f32.gmra.mxu0 %v912
        %v1382 = vpop.f32.mrf.mxu0
        %v1383 = vadd.f32 0.0, %v1382
        %1384 = vmatmul.f32.gmra.mxu0 %v914
        %v1385 = vpop.f32.mrf.mxu0
        %v1386 = vadd.f32 0.0, %v1385
        %1387 = vmatmul.f32.gmra.mxu0 %v916
        %v1388 = vpop.f32.mrf.mxu0
        %v1389 = vadd.f32 0.0, %v1388
        %1390 = vmatmul.f32.gmra.mxu0 %v1348
        %v1391 = vpop.f32.mrf.mxu0
        %v1392 = vadd.f32 0.0, %v1391
        %1393 = vdwg.mxu0
        %v1394 = vadd.f32 %v1334, %v1371
        %v1395 = vadd.f32 %v1335, %v1374
        %v1396 = vadd.f32 %v1336, %v1377
        %v1397 = vadd.f32 %v1337, %v1380
        %v1398 = vadd.f32 %v1338, %v1383
        %v1399 = vadd.f32 %v1339, %v1386
        %v1400 = vadd.f32 %v1340, %v1389
        %v1401 = vadd.f32 %v1341, %v1392
        %1402 = vst [vmem:[%s553] sm:$0xff] %v1394
        %1403 = vst [vmem:[%s553 + $0x8] sm:$0xff] %v1395
        %1404 = vst [vmem:[%s553 + $0x10] sm:$0xff] %v1396
        %1405 = vst [vmem:[%s553 + $0x18] sm:$0xff] %v1397
        %1406 = vst [vmem:[%s553 + $0x20] sm:$0xff] %v1398
        %1407 = vst [vmem:[%s553 + $0x28] sm:$0xff] %v1399
        %1408 = vst [vmem:[%s553 + $0x30] sm:$0xff] %v1400
        %1409 = vst [vmem:[%s553 + $0x38] sm:$0xff] %v1401
        %s1410 = sand.u32 %s289, 1
        %s1411 = scalar_lea.sflag [#allocation3], %s1410
        %s1412 = sand.u32 %s289, 1
        %s1413 = smul.addr %s1412, 64
        %s1414 = scalar_lea.vmem [#allocation2], %s1413
        // Predicated region
        $region53: #{tpu_custom_call.1} parent=51 // pred_check
          %p1415 = pneg %p299
        $region54: #{tpu_custom_call.1} parent=51 // pred_check_branch
          %1417 = sbr.rel (%p1415) target = $region56
        $region55: #{tpu_custom_call.1} parent=51 // pred_region
          %s1418 = smul.u32 8, %s28
          %1420 = vsyncadd %s1411, 0
          %s1421 = sadd.s32 %s29, %s1418
          %s1422 = smul.addr %s27, 8
          %s1423 = sadd.s32 %s1421, %s1422
          %s1424 = smul.addr %s1423, 8
          %s1425 = scalar_lea.hbm %s8, %s1424
          %s1426 = sshll.u32 %s1414, 4
          %s1427 = int_to_ptr.vmem [resolvable:$true] %s1426
          %s1428 = sshll.u32 %s1425, 4
          %s1429 = int_to_ptr.hbm [resolvable:$true] %s1428
          %1434 = dma.vmem_to_hbm [thread:$0]  %s1427, 1024, %s1429, %s1411, 128, 128, 8
        $region56: #{tpu_custom_call.1} parent=51 // pred_fallthru
          _
      $region52: #{tpu_custom_call.1} parent=5 // pred_fallthru
        _
      %p1435 = scmp.le.s32.totalorder 2, %s17
      // Predicated region
      $region57: #{tpu_custom_call.1} parent=5 // pred_check
        %p1436 = pneg %p1435
      $region58: #{tpu_custom_call.1} parent=5 // pred_check_branch
        %1438 = sbr.rel (%p1436) target = $region60
      $region59: #{tpu_custom_call.1} parent=5 // pred_region
        %s1439 = ssub.s32 %s17, 2
        // Predicated region
        $region61: #{tpu_custom_call.1} parent=59 // pred_check
          %p1440 = pneg %p305
        $region62: #{tpu_custom_call.1} parent=59 // pred_check_branch
          %1442 = sbr.rel (%p1440) target = $region64
        $region63: #{tpu_custom_call.1} parent=59 // pred_region
          %s1443 = sand.u32 %s290, 1
          %s1444 = scalar_lea.sflag [#allocation3], %s1443
          %s1445 = sand.u32 %s290, 1
          %s1446 = smul.addr %s1445, 64
          %s1447 = scalar_lea.vmem [#allocation2], %s1446
          %1449 = dma.done %s1444, 1024
        $region64: #{tpu_custom_call.1} parent=59 // pred_fallthru
          _
      $region60: #{tpu_custom_call.1} parent=5 // pred_fallthru
        _
    $region6: #{tpu_custom_call.1} parent=1 // loop_footer
      %s21 = sadd.s32 1, %s17
    $region7: #{tpu_custom_call.1} parent=1 // loop_footer_branch
      %16 = sbr.rel target = $region3
    $region8: #{tpu_custom_call.1} parent=1 // loop_exit
      _
    %1450 = vsyncpa [#allocation3], 1
    %s1451 = scalar_lea.sflag [#allocation3], 1
    %1452 = vsyncpa %s1451, 1

</llo_original>
